<compile_context>
chip_gen: v5e
topology: v5e:2x2
jax: 0.10.0
libtpu: 0.0.40
codegen_flags: <defaults>
</compile_context>

<pallas_src>
import functools
import math

import numpy as np
import jax
import jax.numpy as jnp
from jax import lax
from jax.experimental import pallas as pl
from jax.experimental.pallas import tpu as pltpu


def _gate_kernel(x_ref, mask_ref, w1_ref, b1_ref, w2_ref, b2_ref, sel_ref, wl_ref,
                 bl_ref, out_ref, *, P):
    f32 = jnp.float32
    PP = P * P
    x = x_ref[0]                                          # (C, P*P), one sample

    def shift(a, d):
        # out[:, m] = a[:, (m + d) % PP]; the circular wrap is harmless because every
        # out-of-bounds tap is zeroed by the border masks (or is never read).
        d = d % PP
        if d == 0:
            return a
        return jnp.concatenate([a[:, d:], a[:, :d]], axis=1)

    # ---- MaxPool2d(2): valid at even (h, w); odd lanes carry unused values ----
    pooled = jnp.maximum(jnp.maximum(x, shift(x, 1)),
                         jnp.maximum(shift(x, P), shift(x, P + 1)))

    # ---- 3x3 conv (+ folded BN) + ReLU, as 9 accumulated (C,C)@(C,PP) matmuls.
    #      One pooled pixel == 2 original pixels, so taps move by 2 lanes / 2*P lanes.
    def conv3x3_bn_relu(a, w_taps_ref, bias):
        acc = None
        for kh in range(3):
            for kw in range(3):
                t = kh * 3 + kw
                d = 2 * (kh - 1) * P + 2 * (kw - 1)
                tap = shift(a, d) * mask_ref[t]                     # zero padding
                y = jnp.dot(w_taps_ref[t], tap, preferred_element_type=f32)
                acc = y if acc is None else acc + y
        return jnp.maximum(acc + bias, 0.0)

    h1 = conv3x3_bn_relu(pooled, w1_ref, b1_ref[...])   # valid where (h, w) % 2 == 0
    h2 = conv3x3_bn_relu(h1, w2_ref, b2_ref[...])       # valid where (h, w) % 4 == 0

    # ---- AvgPool over the whole Ho x Wo map, fused with the 1x1 linear layer ----
    zmap = jnp.dot(wl_ref[...], h2, preferred_element_type=f32)            # (2, PP)
    z = jnp.sum(zmap * sel_ref[...], axis=-1, keepdims=True) + bl_ref[...]  # (2, 1)

    # ---- LogSoftmax over the 2 classes; gate == (softmax[:,1] > 0.5) == (z1 > z0) ----
    z0, z1 = z[0:1, :], z[1:2, :]
    zm = jnp.maximum(z0, z1)
    lse = zm + jnp.log(jnp.exp(z0 - zm) + jnp.exp(z1 - zm))
    lp0, lp1 = z0 - lse, z1 - lse
    gate = (z1 > z0).astype(f32)

    # Lane-dense output row: [logp0, logp1, gate, 0, ..., 0]  (128 lanes, unmasked store)
    lane = lax.broadcasted_iota(jnp.int32, (1, 128), 1)
    row = jnp.where(lane == 0, lp0,
          jnp.where(lane == 1, lp1,
          jnp.where(lane == 2, gate, f32(0.0))))
    out_ref[0] = row


@jax.jit
def feedforward_gate_i(x_nchw, params):
    """x_nchw: (N, C, P, P) float32, with P == the gate's pool_size."""
    N, C, P, Pw = x_nchw.shape
    assert P == Pw and P % 2 == 0
    Hp = P // 2                                  # after MaxPool2d(2)
    Ho = (Hp - 1) // 2 + 1                       # after conv2 (k=3, stride=2, pad=1)
    assert math.floor(math.floor(P / 2) / 2 + 0.5) == Ho, \
        "input spatial size must equal the gate's pool_size"
    PP = P * P
    eps = 1e-5

    x = x_nchw.astype(jnp.float32).reshape(N, C, PP)     # free view of contiguous NCHW

    def fold_bn(gamma, beta, mean, var):
        s = gamma / jnp.sqrt(var + eps)
        return s, beta - mean * s

    s1, b1 = fold_bn(params["bn1_gamma"], params["bn1_beta"],
                     params["bn1_mean"], params["bn1_var"])
    s2, b2 = fold_bn(params["bn2_gamma"], params["bn2_beta"],
                     params["bn2_mean"], params["bn2_var"])

    # Per-tap conv weights with the BN scale folded in: w_taps[kh*3+kw, o, i].
    w1 = jnp.transpose(params["conv1_w"] * s1[:, None, None, None],
                       (2, 3, 0, 1)).reshape(9, C, C)
    w2 = jnp.transpose(params["conv2_w"] * s2[:, None, None, None],
                       (2, 3, 0, 1)).reshape(9, C, C)
    b1c, b2c = b1.reshape(C, 1), b2.reshape(C, 1)
    wl, blc = params["lin_w"].reshape(2, C), params["lin_b"].reshape(2, 1)

    # Tiny host constants: 9 border masks (zero padding for the shifted taps) and the
    # stride-4 averaging selector (fuses stride-2 subsampling with the global avg pool).
    hh, ww = np.meshgrid(np.arange(P), np.arange(P), indexing="ij")
    masks = np.zeros((9, 1, PP), np.float32)
    for kh in range(3):
        for kw in range(3):
            ok = ((hh + 2 * (kh - 1) >= 0) & (hh + 2 * (kh - 1) < P) &
                  (ww + 2 * (kw - 1) >= 0) & (ww + 2 * (kw - 1) < P))
            masks[kh * 3 + kw, 0] = ok.reshape(PP).astype(np.float32)
    sel = (((hh % 4 == 0) & (ww % 4 == 0)).reshape(1, PP).astype(np.float32)
           / float(Ho * Ho))

    def const_spec(shape):
        return pl.BlockSpec(shape, lambda n: (0,) * len(shape))

    out = pl.pallas_call(
        functools.partial(_gate_kernel, P=P),
        grid=(N,),
        in_specs=[
            pl.BlockSpec((1, C, PP), lambda n: (n, 0, 0)),   # activation: streams
            const_spec((9, 1, PP)),                          # border masks: resident
            const_spec((9, C, C)),                           # conv1 taps (BN folded)
            const_spec((C, 1)),                              # bn1 bias
            const_spec((9, C, C)),                           # conv2 taps (BN folded)
            const_spec((C, 1)),                              # bn2 bias
            const_spec((1, PP)),                             # avg / stride-4 selector
            const_spec((2, C)),                              # linear weight
            const_spec((2, 1)),                              # linear bias
        ],
        out_specs=pl.BlockSpec((1, 1, 128), lambda n: (n, 0, 0)),
        out_shape=jax.ShapeDtypeStruct((N, 1, 128), jnp.float32),
        compiler_params=pltpu.CompilerParams(dimension_semantics=("parallel",)),
    )(x, jnp.asarray(masks), w1, b1c, w2, b2c, jnp.asarray(sel), wl, blc)

    logprob = out[:, 0, 0:2]
    gate = out[:, 0, 2].reshape(N, 1, 1, 1)
    return gate, logprob


def reference(x_nchw, params):
    """Pure-JAX reference (inference-mode BN), for correctness checking."""
    N, C, P, _ = x_nchw.shape
    eps = 1e-5
    hi = lax.Precision.HIGHEST
    x = jnp.transpose(x_nchw, (0, 2, 3, 1)).astype(jnp.float32)          # NHWC
    y = lax.reduce_window(x, -jnp.inf, lax.max, (1, 2, 2, 1), (1, 2, 2, 1), "VALID")
    w1 = jnp.transpose(params["conv1_w"], (2, 3, 1, 0))
    y = lax.conv_general_dilated(y, w1, (1, 1), [(1, 1), (1, 1)],
                                 dimension_numbers=("NHWC", "HWIO", "NHWC"),
                                 precision=hi)
    s1 = params["bn1_gamma"] / jnp.sqrt(params["bn1_var"] + eps)
    y = jnp.maximum(y * s1 + (params["bn1_beta"] - params["bn1_mean"] * s1), 0.0)
    w2 = jnp.transpose(params["conv2_w"], (2, 3, 1, 0))
    y = lax.conv_general_dilated(y, w2, (2, 2), [(1, 1), (1, 1)],
                                 dimension_numbers=("NHWC", "HWIO", "NHWC"),
                                 precision=hi)
    s2 = params["bn2_gamma"] / jnp.sqrt(params["bn2_var"] + eps)
    y = jnp.maximum(y * s2 + (params["bn2_beta"] - params["bn2_mean"] * s2), 0.0)
    y = jnp.mean(y, axis=(1, 2))                                        # (N, C)
    z = jnp.dot(y, params["lin_w"].reshape(2, C).T, precision=hi) + params["lin_b"]
    logprob = jax.nn.log_softmax(z, axis=-1)
    p1 = jax.nn.softmax(z, axis=-1)[:, 1]
    gate = (p1 > 0.5).astype(jnp.float32).reshape(N, 1, 1, 1)
    return gate, logprob


if __name__ == "__main__":
    N, C, P = 2, 16, 16        # batch=2, channel=16, spatial == gate pool_size == 16
    key = jax.random.PRNGKey(0)
    ks = jax.random.split(key, 13)
    params = {
        "conv1_w":   0.3 * jax.random.normal(ks[0], (C, C, 3, 3), jnp.float32),
        "conv2_w":   0.3 * jax.random.normal(ks[1], (C, C, 3, 3), jnp.float32),
        "bn1_gamma": 1.0 + 0.1 * jax.random.normal(ks[2], (C,), jnp.float32),
        "bn1_beta":  0.1 * jax.random.normal(ks[3], (C,), jnp.float32),
        "bn1_mean":  0.1 * jax.random.normal(ks[4], (C,), jnp.float32),
        "bn1_var":   jax.random.uniform(ks[5], (C,), jnp.float32, 0.5, 1.5),
        "bn2_gamma": 1.0 + 0.1 * jax.random.normal(ks[6], (C,), jnp.float32),
        "bn2_beta":  0.1 * jax.random.normal(ks[7], (C,), jnp.float32),
        "bn2_mean":  0.1 * jax.random.normal(ks[8], (C,), jnp.float32),
        "bn2_var":   jax.random.uniform(ks[9], (C,), jnp.float32, 0.5, 1.5),
        "lin_w":     0.3 * jax.random.normal(ks[10], (2, C, 1, 1), jnp.float32),
        "lin_b":     0.1 * jax.random.normal(ks[11], (2,), jnp.float32),
    }
    x = jax.random.normal(ks[12], (N, C, P, P), jnp.float32)     # NCHW, like PyTorch

    gate, logprob = feedforward_gate_i(x, params)
    jax.block_until_ready((gate, logprob))

    g_ref, lp_ref = reference(x, params)
    assert gate.shape == (N, 1, 1, 1) and logprob.shape == (N, 2)
    # Tolerance covers MXU-vs-XLA-conv accumulation-order differences on the f32 path.
    assert jnp.allclose(logprob, lp_ref, atol=1e-2, rtol=1e-2), (logprob, lp_ref)
    margin = jnp.abs(lp_ref[:, 1] - lp_ref[:, 0])
    assert bool(jnp.all((gate.reshape(-1) == g_ref.reshape(-1)) | (margin < 1e-3)))
    print("KERNEL_OK")
</pallas_src>

<mosaic_0001>
module attributes {stable_mosaic.version = 11 : i64} {
  func.func @_gate_kernel(%arg0: i32, %arg1: memref<1x16x256xf32, #tpu.memory_space<vmem>>, %arg2: memref<9x1x256xf32, #tpu.memory_space<vmem>>, %arg3: memref<9x16x16xf32, #tpu.memory_space<vmem>>, %arg4: memref<16x1xf32, #tpu.memory_space<vmem>>, %arg5: memref<9x16x16xf32, #tpu.memory_space<vmem>>, %arg6: memref<16x1xf32, #tpu.memory_space<vmem>>, %arg7: memref<1x256xf32, #tpu.memory_space<vmem>>, %arg8: memref<2x16xf32, #tpu.memory_space<vmem>>, %arg9: memref<2x1xf32, #tpu.memory_space<vmem>>, %arg10: memref<1x1x128xf32, #tpu.memory_space<vmem>>) attributes {dimension_semantics = [#tpu.dimension_semantics<parallel>], iteration_bounds = array<i64: 2>, scalar_prefetch = 0 : i64, scratch_operands = 0 : i64, tpu.core_type = #tpu.core_type<tc>, window_params = [{transform_indices = @transform_0, window_bounds = array<i64: 1, 16, 256>}, {pipeline_mode = #tpu.pipeline_mode<synchronous>, transform_indices = @transform_1, window_bounds = array<i64: 9, 1, 256>}, {pipeline_mode = #tpu.pipeline_mode<synchronous>, transform_indices = @transform_2, window_bounds = array<i64: 9, 16, 16>}, {pipeline_mode = #tpu.pipeline_mode<synchronous>, transform_indices = @transform_3, window_bounds = array<i64: 16, 1>}, {pipeline_mode = #tpu.pipeline_mode<synchronous>, transform_indices = @transform_4, window_bounds = array<i64: 9, 16, 16>}, {pipeline_mode = #tpu.pipeline_mode<synchronous>, transform_indices = @transform_5, window_bounds = array<i64: 16, 1>}, {pipeline_mode = #tpu.pipeline_mode<synchronous>, transform_indices = @transform_6, window_bounds = array<i64: 1, 256>}, {pipeline_mode = #tpu.pipeline_mode<synchronous>, transform_indices = @transform_7, window_bounds = array<i64: 2, 16>}, {pipeline_mode = #tpu.pipeline_mode<synchronous>, transform_indices = @transform_8, window_bounds = array<i64: 2, 1>}, {transform_indices = @transform_9, window_bounds = array<i64: 1, 1, 128>}]} {
    %c0 = arith.constant 0 : index
    %c0_0 = arith.constant 0 : index
    %c0_1 = arith.constant 0 : index
    %0 = vector.load %arg1[%c0, %c0_0, %c0_1] : memref<1x16x256xf32, #tpu.memory_space<vmem>>, vector<1x16x256xf32>
    %1 = vector.shape_cast %0 : vector<1x16x256xf32> to vector<16x256xf32>
    %2 = vector.extract_strided_slice %1 {offsets = [0, 1], sizes = [16, 255], strides = [1, 1]} : vector<16x256xf32> to vector<16x255xf32>
    %3 = vector.extract_strided_slice %1 {offsets = [0, 0], sizes = [16, 1], strides = [1, 1]} : vector<16x256xf32> to vector<16x1xf32>
    %4 = tpu.concatenate %2, %3 in 1 : vector<16x255xf32>, vector<16x1xf32> -> vector<16x256xf32>
    %5 = arith.maximumf %1, %4 : vector<16x256xf32>
    %6 = vector.extract_strided_slice %1 {offsets = [0, 16], sizes = [16, 240], strides = [1, 1]} : vector<16x256xf32> to vector<16x240xf32>
    %7 = vector.extract_strided_slice %1 {offsets = [0, 0], sizes = [16, 16], strides = [1, 1]} : vector<16x256xf32> to vector<16x16xf32>
    %8 = tpu.concatenate %6, %7 in 1 : vector<16x240xf32>, vector<16x16xf32> -> vector<16x256xf32>
    %9 = vector.extract_strided_slice %1 {offsets = [0, 17], sizes = [16, 239], strides = [1, 1]} : vector<16x256xf32> to vector<16x239xf32>
    %10 = vector.extract_strided_slice %1 {offsets = [0, 0], sizes = [16, 17], strides = [1, 1]} : vector<16x256xf32> to vector<16x17xf32>
    %11 = tpu.concatenate %9, %10 in 1 : vector<16x239xf32>, vector<16x17xf32> -> vector<16x256xf32>
    %12 = arith.maximumf %8, %11 : vector<16x256xf32>
    %13 = arith.maximumf %5, %12 : vector<16x256xf32>
    %c0_2 = arith.constant 0 : index
    %c0_3 = arith.constant 0 : index
    %14 = vector.load %arg4[%c0_2, %c0_3] : memref<16x1xf32, #tpu.memory_space<vmem>>, vector<16x1xf32>
    %15 = vector.extract_strided_slice %13 {offsets = [0, 222], sizes = [16, 34], strides = [1, 1]} : vector<16x256xf32> to vector<16x34xf32>
    %16 = vector.extract_strided_slice %13 {offsets = [0, 0], sizes = [16, 222], strides = [1, 1]} : vector<16x256xf32> to vector<16x222xf32>
    %17 = tpu.concatenate %15, %16 in 1 : vector<16x34xf32>, vector<16x222xf32> -> vector<16x256xf32>
    %c0_4 = arith.constant 0 : index
    %c0_5 = arith.constant 0 : index
    %c0_6 = arith.constant 0 : index
    %18 = vector.load %arg2[%c0_4, %c0_5, %c0_6] : memref<9x1x256xf32, #tpu.memory_space<vmem>>, vector<1x1x256xf32>
    %19 = vector.shape_cast %18 : vector<1x1x256xf32> to vector<1x256xf32>
    %20 = vector.broadcast %19 : vector<1x256xf32> to vector<16x256xf32>
    %21 = arith.mulf %17, %20 : vector<16x256xf32>
    %c0_7 = arith.constant 0 : index
    %c0_8 = arith.constant 0 : index
    %c0_9 = arith.constant 0 : index
    %22 = vector.load %arg3[%c0_7, %c0_8, %c0_9] : memref<9x16x16xf32, #tpu.memory_space<vmem>>, vector<1x16x16xf32>
    %23 = vector.shape_cast %22 : vector<1x16x16xf32> to vector<16x16xf32>
    %cst = arith.constant dense<0.000000e+00> : vector<16x256xf32>
    %24 = tpu.matmul %23, %21, %cst {dimension_numbers = #tpu.dot_dimension_numbers<[1], [0], [0], [1], [0, 0, 1, 1], [], []>} : vector<16x16xf32>, vector<16x256xf32>, vector<16x256xf32> -> vector<16x256xf32>
    %25 = vector.extract_strided_slice %13 {offsets = [0, 224], sizes = [16, 32], strides = [1, 1]} : vector<16x256xf32> to vector<16x32xf32>
    %26 = vector.extract_strided_slice %13 {offsets = [0, 0], sizes = [16, 224], strides = [1, 1]} : vector<16x256xf32> to vector<16x224xf32>
    %27 = tpu.concatenate %25, %26 in 1 : vector<16x32xf32>, vector<16x224xf32> -> vector<16x256xf32>
    %c1 = arith.constant 1 : index
    %c0_10 = arith.constant 0 : index
    %c0_11 = arith.constant 0 : index
    %28 = vector.load %arg2[%c1, %c0_10, %c0_11] : memref<9x1x256xf32, #tpu.memory_space<vmem>>, vector<1x1x256xf32>
    %29 = vector.shape_cast %28 : vector<1x1x256xf32> to vector<1x256xf32>
    %30 = vector.broadcast %29 : vector<1x256xf32> to vector<16x256xf32>
    %31 = arith.mulf %27, %30 : vector<16x256xf32>
    %c1_12 = arith.constant 1 : index
    %c0_13 = arith.constant 0 : index
    %c0_14 = arith.constant 0 : index
    %32 = vector.load %arg3[%c1_12, %c0_13, %c0_14] : memref<9x16x16xf32, #tpu.memory_space<vmem>>, vector<1x16x16xf32>
    %33 = vector.shape_cast %32 : vector<1x16x16xf32> to vector<16x16xf32>
    %cst_15 = arith.constant dense<0.000000e+00> : vector<16x256xf32>
    %34 = tpu.matmul %33, %31, %cst_15 {dimension_numbers = #tpu.dot_dimension_numbers<[1], [0], [0], [1], [0, 0, 1, 1], [], []>} : vector<16x16xf32>, vector<16x256xf32>, vector<16x256xf32> -> vector<16x256xf32>
    %35 = arith.addf %24, %34 : vector<16x256xf32>
    %36 = vector.extract_strided_slice %13 {offsets = [0, 226], sizes = [16, 30], strides = [1, 1]} : vector<16x256xf32> to vector<16x30xf32>
    %37 = vector.extract_strided_slice %13 {offsets = [0, 0], sizes = [16, 226], strides = [1, 1]} : vector<16x256xf32> to vector<16x226xf32>
    %38 = tpu.concatenate %36, %37 in 1 : vector<16x30xf32>, vector<16x226xf32> -> vector<16x256xf32>
    %c2 = arith.constant 2 : index
    %c0_16 = arith.constant 0 : index
    %c0_17 = arith.constant 0 : index
    %39 = vector.load %arg2[%c2, %c0_16, %c0_17] : memref<9x1x256xf32, #tpu.memory_space<vmem>>, vector<1x1x256xf32>
    %40 = vector.shape_cast %39 : vector<1x1x256xf32> to vector<1x256xf32>
    %41 = vector.broadcast %40 : vector<1x256xf32> to vector<16x256xf32>
    %42 = arith.mulf %38, %41 : vector<16x256xf32>
    %c2_18 = arith.constant 2 : index
    %c0_19 = arith.constant 0 : index
    %c0_20 = arith.constant 0 : index
    %43 = vector.load %arg3[%c2_18, %c0_19, %c0_20] : memref<9x16x16xf32, #tpu.memory_space<vmem>>, vector<1x16x16xf32>
    %44 = vector.shape_cast %43 : vector<1x16x16xf32> to vector<16x16xf32>
    %cst_21 = arith.constant dense<0.000000e+00> : vector<16x256xf32>
    %45 = tpu.matmul %44, %42, %cst_21 {dimension_numbers = #tpu.dot_dimension_numbers<[1], [0], [0], [1], [0, 0, 1, 1], [], []>} : vector<16x16xf32>, vector<16x256xf32>, vector<16x256xf32> -> vector<16x256xf32>
    %46 = arith.addf %35, %45 : vector<16x256xf32>
    %47 = vector.extract_strided_slice %13 {offsets = [0, 254], sizes = [16, 2], strides = [1, 1]} : vector<16x256xf32> to vector<16x2xf32>
    %48 = vector.extract_strided_slice %13 {offsets = [0, 0], sizes = [16, 254], strides = [1, 1]} : vector<16x256xf32> to vector<16x254xf32>
    %49 = tpu.concatenate %47, %48 in 1 : vector<16x2xf32>, vector<16x254xf32> -> vector<16x256xf32>
    %c3 = arith.constant 3 : index
    %c0_22 = arith.constant 0 : index
    %c0_23 = arith.constant 0 : index
    %50 = vector.load %arg2[%c3, %c0_22, %c0_23] : memref<9x1x256xf32, #tpu.memory_space<vmem>>, vector<1x1x256xf32>
    %51 = vector.shape_cast %50 : vector<1x1x256xf32> to vector<1x256xf32>
    %52 = vector.broadcast %51 : vector<1x256xf32> to vector<16x256xf32>
    %53 = arith.mulf %49, %52 : vector<16x256xf32>
    %c3_24 = arith.constant 3 : index
    %c0_25 = arith.constant 0 : index
    %c0_26 = arith.constant 0 : index
    %54 = vector.load %arg3[%c3_24, %c0_25, %c0_26] : memref<9x16x16xf32, #tpu.memory_space<vmem>>, vector<1x16x16xf32>
    %55 = vector.shape_cast %54 : vector<1x16x16xf32> to vector<16x16xf32>
    %cst_27 = arith.constant dense<0.000000e+00> : vector<16x256xf32>
    %56 = tpu.matmul %55, %53, %cst_27 {dimension_numbers = #tpu.dot_dimension_numbers<[1], [0], [0], [1], [0, 0, 1, 1], [], []>} : vector<16x16xf32>, vector<16x256xf32>, vector<16x256xf32> -> vector<16x256xf32>
    %57 = arith.addf %46, %56 : vector<16x256xf32>
    %c4 = arith.constant 4 : index
    %c0_28 = arith.constant 0 : index
    %c0_29 = arith.constant 0 : index
    %58 = vector.load %arg2[%c4, %c0_28, %c0_29] : memref<9x1x256xf32, #tpu.memory_space<vmem>>, vector<1x1x256xf32>
    %59 = vector.shape_cast %58 : vector<1x1x256xf32> to vector<1x256xf32>
    %60 = vector.broadcast %59 : vector<1x256xf32> to vector<16x256xf32>
    %61 = arith.mulf %13, %60 : vector<16x256xf32>
    %c4_30 = arith.constant 4 : index
    %c0_31 = arith.constant 0 : index
    %c0_32 = arith.constant 0 : index
    %62 = vector.load %arg3[%c4_30, %c0_31, %c0_32] : memref<9x16x16xf32, #tpu.memory_space<vmem>>, vector<1x16x16xf32>
    %63 = vector.shape_cast %62 : vector<1x16x16xf32> to vector<16x16xf32>
    %cst_33 = arith.constant dense<0.000000e+00> : vector<16x256xf32>
    %64 = tpu.matmul %63, %61, %cst_33 {dimension_numbers = #tpu.dot_dimension_numbers<[1], [0], [0], [1], [0, 0, 1, 1], [], []>} : vector<16x16xf32>, vector<16x256xf32>, vector<16x256xf32> -> vector<16x256xf32>
    %65 = arith.addf %57, %64 : vector<16x256xf32>
    %66 = vector.extract_strided_slice %13 {offsets = [0, 2], sizes = [16, 254], strides = [1, 1]} : vector<16x256xf32> to vector<16x254xf32>
    %67 = vector.extract_strided_slice %13 {offsets = [0, 0], sizes = [16, 2], strides = [1, 1]} : vector<16x256xf32> to vector<16x2xf32>
    %68 = tpu.concatenate %66, %67 in 1 : vector<16x254xf32>, vector<16x2xf32> -> vector<16x256xf32>
    %c5 = arith.constant 5 : index
    %c0_34 = arith.constant 0 : index
    %c0_35 = arith.constant 0 : index
    %69 = vector.load %arg2[%c5, %c0_34, %c0_35] : memref<9x1x256xf32, #tpu.memory_space<vmem>>, vector<1x1x256xf32>
    %70 = vector.shape_cast %69 : vector<1x1x256xf32> to vector<1x256xf32>
    %71 = vector.broadcast %70 : vector<1x256xf32> to vector<16x256xf32>
    %72 = arith.mulf %68, %71 : vector<16x256xf32>
    %c5_36 = arith.constant 5 : index
    %c0_37 = arith.constant 0 : index
    %c0_38 = arith.constant 0 : index
    %73 = vector.load %arg3[%c5_36, %c0_37, %c0_38] : memref<9x16x16xf32, #tpu.memory_space<vmem>>, vector<1x16x16xf32>
    %74 = vector.shape_cast %73 : vector<1x16x16xf32> to vector<16x16xf32>
    %cst_39 = arith.constant dense<0.000000e+00> : vector<16x256xf32>
    %75 = tpu.matmul %74, %72, %cst_39 {dimension_numbers = #tpu.dot_dimension_numbers<[1], [0], [0], [1], [0, 0, 1, 1], [], []>} : vector<16x16xf32>, vector<16x256xf32>, vector<16x256xf32> -> vector<16x256xf32>
    %76 = arith.addf %65, %75 : vector<16x256xf32>
    %77 = vector.extract_strided_slice %13 {offsets = [0, 30], sizes = [16, 226], strides = [1, 1]} : vector<16x256xf32> to vector<16x226xf32>
    %78 = vector.extract_strided_slice %13 {offsets = [0, 0], sizes = [16, 30], strides = [1, 1]} : vector<16x256xf32> to vector<16x30xf32>
    %79 = tpu.concatenate %77, %78 in 1 : vector<16x226xf32>, vector<16x30xf32> -> vector<16x256xf32>
    %c6 = arith.constant 6 : index
    %c0_40 = arith.constant 0 : index
    %c0_41 = arith.constant 0 : index
    %80 = vector.load %arg2[%c6, %c0_40, %c0_41] : memref<9x1x256xf32, #tpu.memory_space<vmem>>, vector<1x1x256xf32>
    %81 = vector.shape_cast %80 : vector<1x1x256xf32> to vector<1x256xf32>
    %82 = vector.broadcast %81 : vector<1x256xf32> to vector<16x256xf32>
    %83 = arith.mulf %79, %82 : vector<16x256xf32>
    %c6_42 = arith.constant 6 : index
    %c0_43 = arith.constant 0 : index
    %c0_44 = arith.constant 0 : index
    %84 = vector.load %arg3[%c6_42, %c0_43, %c0_44] : memref<9x16x16xf32, #tpu.memory_space<vmem>>, vector<1x16x16xf32>
    %85 = vector.shape_cast %84 : vector<1x16x16xf32> to vector<16x16xf32>
    %cst_45 = arith.constant dense<0.000000e+00> : vector<16x256xf32>
    %86 = tpu.matmul %85, %83, %cst_45 {dimension_numbers = #tpu.dot_dimension_numbers<[1], [0], [0], [1], [0, 0, 1, 1], [], []>} : vector<16x16xf32>, vector<16x256xf32>, vector<16x256xf32> -> vector<16x256xf32>
    %87 = arith.addf %76, %86 : vector<16x256xf32>
    %88 = vector.extract_strided_slice %13 {offsets = [0, 32], sizes = [16, 224], strides = [1, 1]} : vector<16x256xf32> to vector<16x224xf32>
    %89 = vector.extract_strided_slice %13 {offsets = [0, 0], sizes = [16, 32], strides = [1, 1]} : vector<16x256xf32> to vector<16x32xf32>
    %90 = tpu.concatenate %88, %89 in 1 : vector<16x224xf32>, vector<16x32xf32> -> vector<16x256xf32>
    %c7 = arith.constant 7 : index
    %c0_46 = arith.constant 0 : index
    %c0_47 = arith.constant 0 : index
    %91 = vector.load %arg2[%c7, %c0_46, %c0_47] : memref<9x1x256xf32, #tpu.memory_space<vmem>>, vector<1x1x256xf32>
    %92 = vector.shape_cast %91 : vector<1x1x256xf32> to vector<1x256xf32>
    %93 = vector.broadcast %92 : vector<1x256xf32> to vector<16x256xf32>
    %94 = arith.mulf %90, %93 : vector<16x256xf32>
    %c7_48 = arith.constant 7 : index
    %c0_49 = arith.constant 0 : index
    %c0_50 = arith.constant 0 : index
    %95 = vector.load %arg3[%c7_48, %c0_49, %c0_50] : memref<9x16x16xf32, #tpu.memory_space<vmem>>, vector<1x16x16xf32>
    %96 = vector.shape_cast %95 : vector<1x16x16xf32> to vector<16x16xf32>
    %cst_51 = arith.constant dense<0.000000e+00> : vector<16x256xf32>
    %97 = tpu.matmul %96, %94, %cst_51 {dimension_numbers = #tpu.dot_dimension_numbers<[1], [0], [0], [1], [0, 0, 1, 1], [], []>} : vector<16x16xf32>, vector<16x256xf32>, vector<16x256xf32> -> vector<16x256xf32>
    %98 = arith.addf %87, %97 : vector<16x256xf32>
    %99 = vector.extract_strided_slice %13 {offsets = [0, 34], sizes = [16, 222], strides = [1, 1]} : vector<16x256xf32> to vector<16x222xf32>
    %100 = vector.extract_strided_slice %13 {offsets = [0, 0], sizes = [16, 34], strides = [1, 1]} : vector<16x256xf32> to vector<16x34xf32>
    %101 = tpu.concatenate %99, %100 in 1 : vector<16x222xf32>, vector<16x34xf32> -> vector<16x256xf32>
    %c8 = arith.constant 8 : index
    %c0_52 = arith.constant 0 : index
    %c0_53 = arith.constant 0 : index
    %102 = vector.load %arg2[%c8, %c0_52, %c0_53] : memref<9x1x256xf32, #tpu.memory_space<vmem>>, vector<1x1x256xf32>
    %103 = vector.shape_cast %102 : vector<1x1x256xf32> to vector<1x256xf32>
    %104 = vector.broadcast %103 : vector<1x256xf32> to vector<16x256xf32>
    %105 = arith.mulf %101, %104 : vector<16x256xf32>
    %c8_54 = arith.constant 8 : index
    %c0_55 = arith.constant 0 : index
    %c0_56 = arith.constant 0 : index
    %106 = vector.load %arg3[%c8_54, %c0_55, %c0_56] : memref<9x16x16xf32, #tpu.memory_space<vmem>>, vector<1x16x16xf32>
    %107 = vector.shape_cast %106 : vector<1x16x16xf32> to vector<16x16xf32>
    %cst_57 = arith.constant dense<0.000000e+00> : vector<16x256xf32>
    %108 = tpu.matmul %107, %105, %cst_57 {dimension_numbers = #tpu.dot_dimension_numbers<[1], [0], [0], [1], [0, 0, 1, 1], [], []>} : vector<16x16xf32>, vector<16x256xf32>, vector<16x256xf32> -> vector<16x256xf32>
    %109 = arith.addf %98, %108 : vector<16x256xf32>
    %110 = vector.broadcast %14 : vector<16x1xf32> to vector<16x256xf32>
    %111 = arith.addf %109, %110 : vector<16x256xf32>
    %cst_58 = arith.constant 0.000000e+00 : f32
    %112 = vector.broadcast %cst_58 : f32 to vector<16x256xf32>
    %113 = arith.maximumf %111, %112 : vector<16x256xf32>
    %c0_59 = arith.constant 0 : index
    %c0_60 = arith.constant 0 : index
    %114 = vector.load %arg6[%c0_59, %c0_60] : memref<16x1xf32, #tpu.memory_space<vmem>>, vector<16x1xf32>
    %115 = vector.extract_strided_slice %113 {offsets = [0, 222], sizes = [16, 34], strides = [1, 1]} : vector<16x256xf32> to vector<16x34xf32>
    %116 = vector.extract_strided_slice %113 {offsets = [0, 0], sizes = [16, 222], strides = [1, 1]} : vector<16x256xf32> to vector<16x222xf32>
    %117 = tpu.concatenate %115, %116 in 1 : vector<16x34xf32>, vector<16x222xf32> -> vector<16x256xf32>
    %c0_61 = arith.constant 0 : index
    %c0_62 = arith.constant 0 : index
    %c0_63 = arith.constant 0 : index
    %118 = vector.load %arg2[%c0_61, %c0_62, %c0_63] : memref<9x1x256xf32, #tpu.memory_space<vmem>>, vector<1x1x256xf32>
    %119 = vector.shape_cast %118 : vector<1x1x256xf32> to vector<1x256xf32>
    %120 = vector.broadcast %119 : vector<1x256xf32> to vector<16x256xf32>
    %121 = arith.mulf %117, %120 : vector<16x256xf32>
    %c0_64 = arith.constant 0 : index
    %c0_65 = arith.constant 0 : index
    %c0_66 = arith.constant 0 : index
    %122 = vector.load %arg5[%c0_64, %c0_65, %c0_66] : memref<9x16x16xf32, #tpu.memory_space<vmem>>, vector<1x16x16xf32>
    %123 = vector.shape_cast %122 : vector<1x16x16xf32> to vector<16x16xf32>
    %cst_67 = arith.constant dense<0.000000e+00> : vector<16x256xf32>
    %124 = tpu.matmul %123, %121, %cst_67 {dimension_numbers = #tpu.dot_dimension_numbers<[1], [0], [0], [1], [0, 0, 1, 1], [], []>} : vector<16x16xf32>, vector<16x256xf32>, vector<16x256xf32> -> vector<16x256xf32>
    %125 = vector.extract_strided_slice %113 {offsets = [0, 224], sizes = [16, 32], strides = [1, 1]} : vector<16x256xf32> to vector<16x32xf32>
    %126 = vector.extract_strided_slice %113 {offsets = [0, 0], sizes = [16, 224], strides = [1, 1]} : vector<16x256xf32> to vector<16x224xf32>
    %127 = tpu.concatenate %125, %126 in 1 : vector<16x32xf32>, vector<16x224xf32> -> vector<16x256xf32>
    %c1_68 = arith.constant 1 : index
    %c0_69 = arith.constant 0 : index
    %c0_70 = arith.constant 0 : index
    %128 = vector.load %arg2[%c1_68, %c0_69, %c0_70] : memref<9x1x256xf32, #tpu.memory_space<vmem>>, vector<1x1x256xf32>
    %129 = vector.shape_cast %128 : vector<1x1x256xf32> to vector<1x256xf32>
    %130 = vector.broadcast %129 : vector<1x256xf32> to vector<16x256xf32>
    %131 = arith.mulf %127, %130 : vector<16x256xf32>
    %c1_71 = arith.constant 1 : index
    %c0_72 = arith.constant 0 : index
    %c0_73 = arith.constant 0 : index
    %132 = vector.load %arg5[%c1_71, %c0_72, %c0_73] : memref<9x16x16xf32, #tpu.memory_space<vmem>>, vector<1x16x16xf32>
    %133 = vector.shape_cast %132 : vector<1x16x16xf32> to vector<16x16xf32>
    %cst_74 = arith.constant dense<0.000000e+00> : vector<16x256xf32>
    %134 = tpu.matmul %133, %131, %cst_74 {dimension_numbers = #tpu.dot_dimension_numbers<[1], [0], [0], [1], [0, 0, 1, 1], [], []>} : vector<16x16xf32>, vector<16x256xf32>, vector<16x256xf32> -> vector<16x256xf32>
    %135 = arith.addf %124, %134 : vector<16x256xf32>
    %136 = vector.extract_strided_slice %113 {offsets = [0, 226], sizes = [16, 30], strides = [1, 1]} : vector<16x256xf32> to vector<16x30xf32>
    %137 = vector.extract_strided_slice %113 {offsets = [0, 0], sizes = [16, 226], strides = [1, 1]} : vector<16x256xf32> to vector<16x226xf32>
    %138 = tpu.concatenate %136, %137 in 1 : vector<16x30xf32>, vector<16x226xf32> -> vector<16x256xf32>
    %c2_75 = arith.constant 2 : index
    %c0_76 = arith.constant 0 : index
    %c0_77 = arith.constant 0 : index
    %139 = vector.load %arg2[%c2_75, %c0_76, %c0_77] : memref<9x1x256xf32, #tpu.memory_space<vmem>>, vector<1x1x256xf32>
    %140 = vector.shape_cast %139 : vector<1x1x256xf32> to vector<1x256xf32>
    %141 = vector.broadcast %140 : vector<1x256xf32> to vector<16x256xf32>
    %142 = arith.mulf %138, %141 : vector<16x256xf32>
    %c2_78 = arith.constant 2 : index
    %c0_79 = arith.constant 0 : index
    %c0_80 = arith.constant 0 : index
    %143 = vector.load %arg5[%c2_78, %c0_79, %c0_80] : memref<9x16x16xf32, #tpu.memory_space<vmem>>, vector<1x16x16xf32>
    %144 = vector.shape_cast %143 : vector<1x16x16xf32> to vector<16x16xf32>
    %cst_81 = arith.constant dense<0.000000e+00> : vector<16x256xf32>
    %145 = tpu.matmul %144, %142, %cst_81 {dimension_numbers = #tpu.dot_dimension_numbers<[1], [0], [0], [1], [0, 0, 1, 1], [], []>} : vector<16x16xf32>, vector<16x256xf32>, vector<16x256xf32> -> vector<16x256xf32>
    %146 = arith.addf %135, %145 : vector<16x256xf32>
    %147 = vector.extract_strided_slice %113 {offsets = [0, 254], sizes = [16, 2], strides = [1, 1]} : vector<16x256xf32> to vector<16x2xf32>
    %148 = vector.extract_strided_slice %113 {offsets = [0, 0], sizes = [16, 254], strides = [1, 1]} : vector<16x256xf32> to vector<16x254xf32>
    %149 = tpu.concatenate %147, %148 in 1 : vector<16x2xf32>, vector<16x254xf32> -> vector<16x256xf32>
    %c3_82 = arith.constant 3 : index
    %c0_83 = arith.constant 0 : index
    %c0_84 = arith.constant 0 : index
    %150 = vector.load %arg2[%c3_82, %c0_83, %c0_84] : memref<9x1x256xf32, #tpu.memory_space<vmem>>, vector<1x1x256xf32>
    %151 = vector.shape_cast %150 : vector<1x1x256xf32> to vector<1x256xf32>
    %152 = vector.broadcast %151 : vector<1x256xf32> to vector<16x256xf32>
    %153 = arith.mulf %149, %152 : vector<16x256xf32>
    %c3_85 = arith.constant 3 : index
    %c0_86 = arith.constant 0 : index
    %c0_87 = arith.constant 0 : index
    %154 = vector.load %arg5[%c3_85, %c0_86, %c0_87] : memref<9x16x16xf32, #tpu.memory_space<vmem>>, vector<1x16x16xf32>
    %155 = vector.shape_cast %154 : vector<1x16x16xf32> to vector<16x16xf32>
    %cst_88 = arith.constant dense<0.000000e+00> : vector<16x256xf32>
    %156 = tpu.matmul %155, %153, %cst_88 {dimension_numbers = #tpu.dot_dimension_numbers<[1], [0], [0], [1], [0, 0, 1, 1], [], []>} : vector<16x16xf32>, vector<16x256xf32>, vector<16x256xf32> -> vector<16x256xf32>
    %157 = arith.addf %146, %156 : vector<16x256xf32>
    %c4_89 = arith.constant 4 : index
    %c0_90 = arith.constant 0 : index
    %c0_91 = arith.constant 0 : index
    %158 = vector.load %arg2[%c4_89, %c0_90, %c0_91] : memref<9x1x256xf32, #tpu.memory_space<vmem>>, vector<1x1x256xf32>
    %159 = vector.shape_cast %158 : vector<1x1x256xf32> to vector<1x256xf32>
    %160 = vector.broadcast %159 : vector<1x256xf32> to vector<16x256xf32>
    %161 = arith.mulf %113, %160 : vector<16x256xf32>
    %c4_92 = arith.constant 4 : index
    %c0_93 = arith.constant 0 : index
    %c0_94 = arith.constant 0 : index
    %162 = vector.load %arg5[%c4_92, %c0_93, %c0_94] : memref<9x16x16xf32, #tpu.memory_space<vmem>>, vector<1x16x16xf32>
    %163 = vector.shape_cast %162 : vector<1x16x16xf32> to vector<16x16xf32>
    %cst_95 = arith.constant dense<0.000000e+00> : vector<16x256xf32>
    %164 = tpu.matmul %163, %161, %cst_95 {dimension_numbers = #tpu.dot_dimension_numbers<[1], [0], [0], [1], [0, 0, 1, 1], [], []>} : vector<16x16xf32>, vector<16x256xf32>, vector<16x256xf32> -> vector<16x256xf32>
    %165 = arith.addf %157, %164 : vector<16x256xf32>
    %166 = vector.extract_strided_slice %113 {offsets = [0, 2], sizes = [16, 254], strides = [1, 1]} : vector<16x256xf32> to vector<16x254xf32>
    %167 = vector.extract_strided_slice %113 {offsets = [0, 0], sizes = [16, 2], strides = [1, 1]} : vector<16x256xf32> to vector<16x2xf32>
    %168 = tpu.concatenate %166, %167 in 1 : vector<16x254xf32>, vector<16x2xf32> -> vector<16x256xf32>
    %c5_96 = arith.constant 5 : index
    %c0_97 = arith.constant 0 : index
    %c0_98 = arith.constant 0 : index
    %169 = vector.load %arg2[%c5_96, %c0_97, %c0_98] : memref<9x1x256xf32, #tpu.memory_space<vmem>>, vector<1x1x256xf32>
    %170 = vector.shape_cast %169 : vector<1x1x256xf32> to vector<1x256xf32>
    %171 = vector.broadcast %170 : vector<1x256xf32> to vector<16x256xf32>
    %172 = arith.mulf %168, %171 : vector<16x256xf32>
    %c5_99 = arith.constant 5 : index
    %c0_100 = arith.constant 0 : index
    %c0_101 = arith.constant 0 : index
    %173 = vector.load %arg5[%c5_99, %c0_100, %c0_101] : memref<9x16x16xf32, #tpu.memory_space<vmem>>, vector<1x16x16xf32>
    %174 = vector.shape_cast %173 : vector<1x16x16xf32> to vector<16x16xf32>
    %cst_102 = arith.constant dense<0.000000e+00> : vector<16x256xf32>
    %175 = tpu.matmul %174, %172, %cst_102 {dimension_numbers = #tpu.dot_dimension_numbers<[1], [0], [0], [1], [0, 0, 1, 1], [], []>} : vector<16x16xf32>, vector<16x256xf32>, vector<16x256xf32> -> vector<16x256xf32>
    %176 = arith.addf %165, %175 : vector<16x256xf32>
    %177 = vector.extract_strided_slice %113 {offsets = [0, 30], sizes = [16, 226], strides = [1, 1]} : vector<16x256xf32> to vector<16x226xf32>
    %178 = vector.extract_strided_slice %113 {offsets = [0, 0], sizes = [16, 30], strides = [1, 1]} : vector<16x256xf32> to vector<16x30xf32>
    %179 = tpu.concatenate %177, %178 in 1 : vector<16x226xf32>, vector<16x30xf32> -> vector<16x256xf32>
    %c6_103 = arith.constant 6 : index
    %c0_104 = arith.constant 0 : index
    %c0_105 = arith.constant 0 : index
    %180 = vector.load %arg2[%c6_103, %c0_104, %c0_105] : memref<9x1x256xf32, #tpu.memory_space<vmem>>, vector<1x1x256xf32>
    %181 = vector.shape_cast %180 : vector<1x1x256xf32> to vector<1x256xf32>
    %182 = vector.broadcast %181 : vector<1x256xf32> to vector<16x256xf32>
    %183 = arith.mulf %179, %182 : vector<16x256xf32>
    %c6_106 = arith.constant 6 : index
    %c0_107 = arith.constant 0 : index
    %c0_108 = arith.constant 0 : index
    %184 = vector.load %arg5[%c6_106, %c0_107, %c0_108] : memref<9x16x16xf32, #tpu.memory_space<vmem>>, vector<1x16x16xf32>
    %185 = vector.shape_cast %184 : vector<1x16x16xf32> to vector<16x16xf32>
    %cst_109 = arith.constant dense<0.000000e+00> : vector<16x256xf32>
    %186 = tpu.matmul %185, %183, %cst_109 {dimension_numbers = #tpu.dot_dimension_numbers<[1], [0], [0], [1], [0, 0, 1, 1], [], []>} : vector<16x16xf32>, vector<16x256xf32>, vector<16x256xf32> -> vector<16x256xf32>
    %187 = arith.addf %176, %186 : vector<16x256xf32>
    %188 = vector.extract_strided_slice %113 {offsets = [0, 32], sizes = [16, 224], strides = [1, 1]} : vector<16x256xf32> to vector<16x224xf32>
    %189 = vector.extract_strided_slice %113 {offsets = [0, 0], sizes = [16, 32], strides = [1, 1]} : vector<16x256xf32> to vector<16x32xf32>
    %190 = tpu.concatenate %188, %189 in 1 : vector<16x224xf32>, vector<16x32xf32> -> vector<16x256xf32>
    %c7_110 = arith.constant 7 : index
    %c0_111 = arith.constant 0 : index
    %c0_112 = arith.constant 0 : index
    %191 = vector.load %arg2[%c7_110, %c0_111, %c0_112] : memref<9x1x256xf32, #tpu.memory_space<vmem>>, vector<1x1x256xf32>
    %192 = vector.shape_cast %191 : vector<1x1x256xf32> to vector<1x256xf32>
    %193 = vector.broadcast %192 : vector<1x256xf32> to vector<16x256xf32>
    %194 = arith.mulf %190, %193 : vector<16x256xf32>
    %c7_113 = arith.constant 7 : index
    %c0_114 = arith.constant 0 : index
    %c0_115 = arith.constant 0 : index
    %195 = vector.load %arg5[%c7_113, %c0_114, %c0_115] : memref<9x16x16xf32, #tpu.memory_space<vmem>>, vector<1x16x16xf32>
    %196 = vector.shape_cast %195 : vector<1x16x16xf32> to vector<16x16xf32>
    %cst_116 = arith.constant dense<0.000000e+00> : vector<16x256xf32>
    %197 = tpu.matmul %196, %194, %cst_116 {dimension_numbers = #tpu.dot_dimension_numbers<[1], [0], [0], [1], [0, 0, 1, 1], [], []>} : vector<16x16xf32>, vector<16x256xf32>, vector<16x256xf32> -> vector<16x256xf32>
    %198 = arith.addf %187, %197 : vector<16x256xf32>
    %199 = vector.extract_strided_slice %113 {offsets = [0, 34], sizes = [16, 222], strides = [1, 1]} : vector<16x256xf32> to vector<16x222xf32>
    %200 = vector.extract_strided_slice %113 {offsets = [0, 0], sizes = [16, 34], strides = [1, 1]} : vector<16x256xf32> to vector<16x34xf32>
    %201 = tpu.concatenate %199, %200 in 1 : vector<16x222xf32>, vector<16x34xf32> -> vector<16x256xf32>
    %c8_117 = arith.constant 8 : index
    %c0_118 = arith.constant 0 : index
    %c0_119 = arith.constant 0 : index
    %202 = vector.load %arg2[%c8_117, %c0_118, %c0_119] : memref<9x1x256xf32, #tpu.memory_space<vmem>>, vector<1x1x256xf32>
    %203 = vector.shape_cast %202 : vector<1x1x256xf32> to vector<1x256xf32>
    %204 = vector.broadcast %203 : vector<1x256xf32> to vector<16x256xf32>
    %205 = arith.mulf %201, %204 : vector<16x256xf32>
    %c8_120 = arith.constant 8 : index
    %c0_121 = arith.constant 0 : index
    %c0_122 = arith.constant 0 : index
    %206 = vector.load %arg5[%c8_120, %c0_121, %c0_122] : memref<9x16x16xf32, #tpu.memory_space<vmem>>, vector<1x16x16xf32>
    %207 = vector.shape_cast %206 : vector<1x16x16xf32> to vector<16x16xf32>
    %cst_123 = arith.constant dense<0.000000e+00> : vector<16x256xf32>
    %208 = tpu.matmul %207, %205, %cst_123 {dimension_numbers = #tpu.dot_dimension_numbers<[1], [0], [0], [1], [0, 0, 1, 1], [], []>} : vector<16x16xf32>, vector<16x256xf32>, vector<16x256xf32> -> vector<16x256xf32>
    %209 = arith.addf %198, %208 : vector<16x256xf32>
    %210 = vector.broadcast %114 : vector<16x1xf32> to vector<16x256xf32>
    %211 = arith.addf %209, %210 : vector<16x256xf32>
    %cst_124 = arith.constant 0.000000e+00 : f32
    %212 = vector.broadcast %cst_124 : f32 to vector<16x256xf32>
    %213 = arith.maximumf %211, %212 : vector<16x256xf32>
    %c0_125 = arith.constant 0 : index
    %c0_126 = arith.constant 0 : index
    %214 = vector.load %arg8[%c0_125, %c0_126] : memref<2x16xf32, #tpu.memory_space<vmem>>, vector<2x16xf32>
    %cst_127 = arith.constant dense<0.000000e+00> : vector<2x256xf32>
    %215 = tpu.matmul %214, %213, %cst_127 {dimension_numbers = #tpu.dot_dimension_numbers<[1], [0], [0], [1], [0, 0, 1, 1], [], []>} : vector<2x16xf32>, vector<16x256xf32>, vector<2x256xf32> -> vector<2x256xf32>
    %c0_128 = arith.constant 0 : index
    %c0_129 = arith.constant 0 : index
    %216 = vector.load %arg7[%c0_128, %c0_129] : memref<1x256xf32, #tpu.memory_space<vmem>>, vector<1x256xf32>
    %217 = vector.broadcast %216 : vector<1x256xf32> to vector<2x256xf32>
    %218 = arith.mulf %215, %217 : vector<2x256xf32>
    %cst_130 = arith.constant dense<0.000000e+00> : vector<2xf32>
    %219 = vector.multi_reduction <add>, %218, %cst_130 [1] : vector<2x256xf32> to vector<2xf32>
    %220 = vector.shape_cast %219 : vector<2xf32> to vector<2x1xf32>
    %c0_131 = arith.constant 0 : index
    %c0_132 = arith.constant 0 : index
    %221 = vector.load %arg9[%c0_131, %c0_132] : memref<2x1xf32, #tpu.memory_space<vmem>>, vector<2x1xf32>
    %222 = arith.addf %220, %221 : vector<2x1xf32>
    %223 = vector.extract_strided_slice %222 {offsets = [0, 0], sizes = [1, 1], strides = [1, 1]} : vector<2x1xf32> to vector<1x1xf32>
    %224 = vector.extract_strided_slice %222 {offsets = [1, 0], sizes = [1, 1], strides = [1, 1]} : vector<2x1xf32> to vector<1x1xf32>
    %225 = arith.maximumf %223, %224 : vector<1x1xf32>
    %226 = arith.subf %223, %225 : vector<1x1xf32>
    %227 = math.exp %226 : vector<1x1xf32>
    %228 = arith.subf %224, %225 : vector<1x1xf32>
    %229 = math.exp %228 : vector<1x1xf32>
    %230 = arith.addf %227, %229 : vector<1x1xf32>
    %231 = math.log %230 : vector<1x1xf32>
    %232 = arith.addf %225, %231 : vector<1x1xf32>
    %233 = arith.subf %223, %232 : vector<1x1xf32>
    %234 = arith.subf %224, %232 : vector<1x1xf32>
    %235 = arith.cmpf ogt, %224, %223 : vector<1x1xf32>
    %236 = arith.extui %235 : vector<1x1xi1> to vector<1x1xi32>
    %237 = arith.sitofp %236 : vector<1x1xi32> to vector<1x1xf32>
    %238 = tpu.iota {dimensions = array<i32: 1>} : vector<1x128xi32>
    %c0_i32 = arith.constant 0 : i32
    %239 = vector.broadcast %c0_i32 : i32 to vector<1x128xi32>
    %240 = arith.cmpi eq, %238, %239 : vector<1x128xi32>
    %c1_i32 = arith.constant 1 : i32
    %241 = vector.broadcast %c1_i32 : i32 to vector<1x128xi32>
    %242 = arith.cmpi eq, %238, %241 : vector<1x128xi32>
    %c2_i32 = arith.constant 2 : i32
    %243 = vector.broadcast %c2_i32 : i32 to vector<1x128xi32>
    %244 = arith.cmpi eq, %238, %243 : vector<1x128xi32>
    %cst_133 = arith.constant 0.000000e+00 : f32
    %245 = vector.shape_cast %237 : vector<1x1xf32> to vector<1x1xf32>
    %246 = vector.broadcast %245 : vector<1x1xf32> to vector<1x128xf32>
    %247 = vector.broadcast %cst_133 : f32 to vector<1x128xf32>
    %248 = arith.select %244, %246, %247 : vector<1x128xi1>, vector<1x128xf32>
    %249 = vector.shape_cast %234 : vector<1x1xf32> to vector<1x1xf32>
    %250 = vector.broadcast %249 : vector<1x1xf32> to vector<1x128xf32>
    %251 = arith.select %242, %250, %248 : vector<1x128xi1>, vector<1x128xf32>
    %252 = vector.shape_cast %233 : vector<1x1xf32> to vector<1x1xf32>
    %253 = vector.broadcast %252 : vector<1x1xf32> to vector<1x128xf32>
    %254 = arith.select %240, %253, %251 : vector<1x128xi1>, vector<1x128xf32>
    %c0_134 = arith.constant 0 : index
    %c0_135 = arith.constant 0 : index
    %c0_136 = arith.constant 0 : index
    %255 = vector.load %arg10[%c0_134, %c0_135, %c0_136] : memref<1x1x128xf32, #tpu.memory_space<vmem>>, vector<1x1x128xf32>
    %256 = vector.shape_cast %255 : vector<1x1x128xf32> to vector<1x128xf32>
    %257 = vector.shape_cast %254 : vector<1x128xf32> to vector<1x1x128xf32>
    tpu.vector_store %arg10[%c0_134, %c0_135, %c0_136], %257 {strides = array<i32>} : memref<1x1x128xf32, #tpu.memory_space<vmem>>, vector<1x1x128xf32>,
    return
  }
  func.func @transform_0(%arg0: i32) -> (i32, i32, i32) {
    %c0_i32 = arith.constant 0 : i32
    %c0_i32_0 = arith.constant 0 : i32
    %c0_i32_1 = arith.constant 0 : i32
    return %arg0, %c0_i32, %c0_i32_0 : i32, i32, i32
  }
  func.func @transform_1(%arg0: i32) -> (i32, i32, i32) {
    %c0_i32 = arith.constant 0 : i32
    %c0_i32_0 = arith.constant 0 : i32
    %c0_i32_1 = arith.constant 0 : i32
    %c0_i32_2 = arith.constant 0 : i32
    return %c0_i32, %c0_i32_0, %c0_i32_1 : i32, i32, i32
  }
  func.func @transform_2(%arg0: i32) -> (i32, i32, i32) {
    %c0_i32 = arith.constant 0 : i32
    %c0_i32_0 = arith.constant 0 : i32
    %c0_i32_1 = arith.constant 0 : i32
    %c0_i32_2 = arith.constant 0 : i32
    return %c0_i32, %c0_i32_0, %c0_i32_1 : i32, i32, i32
  }
  func.func @transform_3(%arg0: i32) -> (i32, i32) {
    %c0_i32 = arith.constant 0 : i32
    %c0_i32_0 = arith.constant 0 : i32
    %c0_i32_1 = arith.constant 0 : i32
    return %c0_i32, %c0_i32_0 : i32, i32
  }
  func.func @transform_4(%arg0: i32) -> (i32, i32, i32) {
    %c0_i32 = arith.constant 0 : i32
    %c0_i32_0 = arith.constant 0 : i32
    %c0_i32_1 = arith.constant 0 : i32
    %c0_i32_2 = arith.constant 0 : i32
    return %c0_i32, %c0_i32_0, %c0_i32_1 : i32, i32, i32
  }
  func.func @transform_5(%arg0: i32) -> (i32, i32) {
    %c0_i32 = arith.constant 0 : i32
    %c0_i32_0 = arith.constant 0 : i32
    %c0_i32_1 = arith.constant 0 : i32
    return %c0_i32, %c0_i32_0 : i32, i32
  }
  func.func @transform_6(%arg0: i32) -> (i32, i32) {
    %c0_i32 = arith.constant 0 : i32
    %c0_i32_0 = arith.constant 0 : i32
    %c0_i32_1 = arith.constant 0 : i32
    return %c0_i32, %c0_i32_0 : i32, i32
  }
  func.func @transform_7(%arg0: i32) -> (i32, i32) {
    %c0_i32 = arith.constant 0 : i32
    %c0_i32_0 = arith.constant 0 : i32
    %c0_i32_1 = arith.constant 0 : i32
    return %c0_i32, %c0_i32_0 : i32, i32
  }
  func.func @transform_8(%arg0: i32) -> (i32, i32) {
    %c0_i32 = arith.constant 0 : i32
    %c0_i32_0 = arith.constant 0 : i32
    %c0_i32_1 = arith.constant 0 : i32
    return %c0_i32, %c0_i32_0 : i32, i32
  }
  func.func @transform_9(%arg0: i32) -> (i32, i32, i32) {
    %c0_i32 = arith.constant 0 : i32
    %c0_i32_0 = arith.constant 0 : i32
    %c0_i32_1 = arith.constant 0 : i32
    return %arg0, %c0_i32, %c0_i32_0 : i32, i32, i32
  }
}

</mosaic_0001>

<llo_original>
// kernel: feedforward_gate_i.1
$region0: #{feedforward_gate_i.1}
  #allocation0 [shape = 'u32[]', space=smem, size = 0x4, offset = 0x4, fixed_abs, tag = 'smem constant byte address 0x4 - core index']
  #allocation1 [shape = 'u32[72,128]{1,0:T(1,128)}', space=vmem, size = 0x9000, scoped, tag = 'internal scratch']
  %s0 = inlined_call_operand.vmem [shape: f32[2,16,256], index: 0, kind: input, shape index: {}]
  %s1 = inlined_call_operand.vmem [shape: f32[9,1,256], index: 1, kind: input, shape index: {}]
  %s2 = inlined_call_operand.vmem [shape: f32[9,16,16], index: 2, kind: input, shape index: {}]
  %s3 = inlined_call_operand.vmem [shape: f32[16,1], index: 3, kind: input, shape index: {}]
  %s4 = inlined_call_operand.vmem [shape: f32[9,16,16], index: 4, kind: input, shape index: {}]
  %s5 = inlined_call_operand.vmem [shape: f32[16,1], index: 5, kind: input, shape index: {}]
  %s6 = inlined_call_operand.vmem [shape: f32[1,256], index: 6, kind: input, shape index: {}]
  %s7 = inlined_call_operand.vmem [shape: f32[2,16], index: 7, kind: input, shape index: {}]
  %s8 = inlined_call_operand.vmem [shape: f32[2,1], index: 8, kind: input, shape index: {}]
  %s9 = inlined_call_operand.vmem [shape: f32[2,1,128], index: 9, kind: output, shape index: {}]
  %s10 = sld [smem:[#allocation0]]
  $region69: #{feedforward_gate_i.1} parent=0
    _
  %s12 = ssub.s32 1, %s10
  %s13 = scalar_select 0, %s12, %s10
  loop: start=0, step=1, limit=4
  $region2: #{feedforward_gate_i.1} parent=0 // loop_pre_header
    _
  $region3: #{feedforward_gate_i.1} parent=0 // loop_header
    %s15 = sphi 0, %s19
    %p16 = scmp.ge.s32.totalorder %s15, 4
    %s25 = sphi 0, %s27
    %s28 = sphi 0, %s25
    %s29 = sphi 0, %s28
    %s45 = sphi 0, %s29
    %s49 = sphi 0, %s49
    %s51 = sphi 0, %s49
    %s52 = sphi 0, %s51
    %s66 = sphi 0, %s52
    %s70 = sphi 0, %s70
    %s72 = sphi 0, %s70
    %s73 = sphi 0, %s72
    %s87 = sphi 0, %s73
    %s91 = sphi 0, %s91
    %s93 = sphi 0, %s91
    %s94 = sphi 0, %s93
    %s108 = sphi 0, %s94
    %s112 = sphi 0, %s112
    %s114 = sphi 0, %s112
    %s115 = sphi 0, %s114
    %s129 = sphi 0, %s115
    %s133 = sphi 0, %s133
    %s135 = sphi 0, %s133
    %s136 = sphi 0, %s135
    %s150 = sphi 0, %s136
    %s154 = sphi 0, %s154
    %s156 = sphi 0, %s154
    %s157 = sphi 0, %s156
    %s171 = sphi 0, %s157
    %s175 = sphi 0, %s175
    %s177 = sphi 0, %s175
    %s178 = sphi 0, %s177
    %s192 = sphi 0, %s178
    %s196 = sphi 0, %s196
    %s198 = sphi 0, %s196
    %s199 = sphi 0, %s198
    %s213 = sphi 0, %s199
    %s219 = sphi 0, %s221
    %s222 = sphi 0, %s219
    %s223 = sphi 0, %s222
    %s239 = sphi 0, %s223
  $region4: #{feedforward_gate_i.1} parent=0 // loop_header_branch
    %18 = sbr.rel (%p16) target = $region8
  $region5: #{feedforward_gate_i.1} parent=0 // loop_body
    %s20 = ssub.s32 %s15, 1
    %s21 = ssub.s32 %s15, 2
    %s22 = sadd.s32 %s15, 1
    %s23 = ssub.s32 %s15, %s22
    %p24 = scmp.eq.s32.totalorder %s23, 0
    %s26 = sadd.s32 %s25, 1
    %s27 = scalar_select %p24, %s25, %s26
    %p30 = pneg %p24
    %p31 = scmp.eq.s32.totalorder %s15, 1
    %p32 = por %p30, %p31
    %p33 = scmp.ne.s32.totalorder %s25, %s28
    %p34 = scmp.eq.s32.totalorder %s15, 0
    %p35 = por %p33, %p34
    %p36 = scmp.ne.s32.totalorder %s25, %s28
    %p37 = scmp.eq.s32.totalorder %s20, 1
    %p38 = por %p36, %p37
    %p39 = scmp.ne.s32.totalorder %s28, %s29
    %p40 = scmp.eq.s32.totalorder %s20, 0
    %p41 = por %p39, %p40
    %p42 = scmp.ne.s32.totalorder %s28, %s29
    %p43 = scmp.eq.s32.totalorder %s21, 1
    %p44 = por %p42, %p43
    %p46 = scmp.ne.s32.totalorder %s29, %s45
    %p47 = scmp.eq.s32.totalorder %s21, 0
    %p48 = por %p46, %p47
    %s50 = sadd.s32 %s49, 1
    %p53 = scmp.eq.s32.totalorder %s15, 1
    %p54 = scmp.ne.s32.totalorder %s49, %s51
    %p55 = scmp.eq.s32.totalorder %s15, 0
    %p56 = por %p54, %p55
    %p57 = scmp.ne.s32.totalorder %s49, %s51
    %p58 = scmp.eq.s32.totalorder %s20, 1
    %p59 = por %p57, %p58
    %p60 = scmp.ne.s32.totalorder %s51, %s52
    %p61 = scmp.eq.s32.totalorder %s20, 0
    %p62 = por %p60, %p61
    %p63 = scmp.ne.s32.totalorder %s51, %s52
    %p64 = scmp.eq.s32.totalorder %s21, 1
    %p65 = por %p63, %p64
    %p67 = scmp.ne.s32.totalorder %s52, %s66
    %p68 = scmp.eq.s32.totalorder %s21, 0
    %p69 = por %p67, %p68
    %s71 = sadd.s32 %s70, 1
    %p74 = scmp.eq.s32.totalorder %s15, 1
    %p75 = scmp.ne.s32.totalorder %s70, %s72
    %p76 = scmp.eq.s32.totalorder %s15, 0
    %p77 = por %p75, %p76
    %p78 = scmp.ne.s32.totalorder %s70, %s72
    %p79 = scmp.eq.s32.totalorder %s20, 1
    %p80 = por %p78, %p79
    %p81 = scmp.ne.s32.totalorder %s72, %s73
    %p82 = scmp.eq.s32.totalorder %s20, 0
    %p83 = por %p81, %p82
    %p84 = scmp.ne.s32.totalorder %s72, %s73
    %p85 = scmp.eq.s32.totalorder %s21, 1
    %p86 = por %p84, %p85
    %p88 = scmp.ne.s32.totalorder %s73, %s87
    %p89 = scmp.eq.s32.totalorder %s21, 0
    %p90 = por %p88, %p89
    %s92 = sadd.s32 %s91, 1
    %p95 = scmp.eq.s32.totalorder %s15, 1
    %p96 = scmp.ne.s32.totalorder %s91, %s93
    %p97 = scmp.eq.s32.totalorder %s15, 0
    %p98 = por %p96, %p97
    %p99 = scmp.ne.s32.totalorder %s91, %s93
    %p100 = scmp.eq.s32.totalorder %s20, 1
    %p101 = por %p99, %p100
    %p102 = scmp.ne.s32.totalorder %s93, %s94
    %p103 = scmp.eq.s32.totalorder %s20, 0
    %p104 = por %p102, %p103
    %p105 = scmp.ne.s32.totalorder %s93, %s94
    %p106 = scmp.eq.s32.totalorder %s21, 1
    %p107 = por %p105, %p106
    %p109 = scmp.ne.s32.totalorder %s94, %s108
    %p110 = scmp.eq.s32.totalorder %s21, 0
    %p111 = por %p109, %p110
    %s113 = sadd.s32 %s112, 1
    %p116 = scmp.eq.s32.totalorder %s15, 1
    %p117 = scmp.ne.s32.totalorder %s112, %s114
    %p118 = scmp.eq.s32.totalorder %s15, 0
    %p119 = por %p117, %p118
    %p120 = scmp.ne.s32.totalorder %s112, %s114
    %p121 = scmp.eq.s32.totalorder %s20, 1
    %p122 = por %p120, %p121
    %p123 = scmp.ne.s32.totalorder %s114, %s115
    %p124 = scmp.eq.s32.totalorder %s20, 0
    %p125 = por %p123, %p124
    %p126 = scmp.ne.s32.totalorder %s114, %s115
    %p127 = scmp.eq.s32.totalorder %s21, 1
    %p128 = por %p126, %p127
    %p130 = scmp.ne.s32.totalorder %s115, %s129
    %p131 = scmp.eq.s32.totalorder %s21, 0
    %p132 = por %p130, %p131
    %s134 = sadd.s32 %s133, 1
    %p137 = scmp.eq.s32.totalorder %s15, 1
    %p138 = scmp.ne.s32.totalorder %s133, %s135
    %p139 = scmp.eq.s32.totalorder %s15, 0
    %p140 = por %p138, %p139
    %p141 = scmp.ne.s32.totalorder %s133, %s135
    %p142 = scmp.eq.s32.totalorder %s20, 1
    %p143 = por %p141, %p142
    %p144 = scmp.ne.s32.totalorder %s135, %s136
    %p145 = scmp.eq.s32.totalorder %s20, 0
    %p146 = por %p144, %p145
    %p147 = scmp.ne.s32.totalorder %s135, %s136
    %p148 = scmp.eq.s32.totalorder %s21, 1
    %p149 = por %p147, %p148
    %p151 = scmp.ne.s32.totalorder %s136, %s150
    %p152 = scmp.eq.s32.totalorder %s21, 0
    %p153 = por %p151, %p152
    %s155 = sadd.s32 %s154, 1
    %p158 = scmp.eq.s32.totalorder %s15, 1
    %p159 = scmp.ne.s32.totalorder %s154, %s156
    %p160 = scmp.eq.s32.totalorder %s15, 0
    %p161 = por %p159, %p160
    %p162 = scmp.ne.s32.totalorder %s154, %s156
    %p163 = scmp.eq.s32.totalorder %s20, 1
    %p164 = por %p162, %p163
    %p165 = scmp.ne.s32.totalorder %s156, %s157
    %p166 = scmp.eq.s32.totalorder %s20, 0
    %p167 = por %p165, %p166
    %p168 = scmp.ne.s32.totalorder %s156, %s157
    %p169 = scmp.eq.s32.totalorder %s21, 1
    %p170 = por %p168, %p169
    %p172 = scmp.ne.s32.totalorder %s157, %s171
    %p173 = scmp.eq.s32.totalorder %s21, 0
    %p174 = por %p172, %p173
    %s176 = sadd.s32 %s175, 1
    %p179 = scmp.eq.s32.totalorder %s15, 1
    %p180 = scmp.ne.s32.totalorder %s175, %s177
    %p181 = scmp.eq.s32.totalorder %s15, 0
    %p182 = por %p180, %p181
    %p183 = scmp.ne.s32.totalorder %s175, %s177
    %p184 = scmp.eq.s32.totalorder %s20, 1
    %p185 = por %p183, %p184
    %p186 = scmp.ne.s32.totalorder %s177, %s178
    %p187 = scmp.eq.s32.totalorder %s20, 0
    %p188 = por %p186, %p187
    %p189 = scmp.ne.s32.totalorder %s177, %s178
    %p190 = scmp.eq.s32.totalorder %s21, 1
    %p191 = por %p189, %p190
    %p193 = scmp.ne.s32.totalorder %s178, %s192
    %p194 = scmp.eq.s32.totalorder %s21, 0
    %p195 = por %p193, %p194
    %s197 = sadd.s32 %s196, 1
    %p200 = scmp.eq.s32.totalorder %s15, 1
    %p201 = scmp.ne.s32.totalorder %s196, %s198
    %p202 = scmp.eq.s32.totalorder %s15, 0
    %p203 = por %p201, %p202
    %p204 = scmp.ne.s32.totalorder %s196, %s198
    %p205 = scmp.eq.s32.totalorder %s20, 1
    %p206 = por %p204, %p205
    %p207 = scmp.ne.s32.totalorder %s198, %s199
    %p208 = scmp.eq.s32.totalorder %s20, 0
    %p209 = por %p207, %p208
    %p210 = scmp.ne.s32.totalorder %s198, %s199
    %p211 = scmp.eq.s32.totalorder %s21, 1
    %p212 = por %p210, %p211
    %p214 = scmp.ne.s32.totalorder %s199, %s213
    %p215 = scmp.eq.s32.totalorder %s21, 0
    %p216 = por %p214, %p215
    %s217 = ssub.s32 %s15, %s22
    %p218 = scmp.eq.s32.totalorder %s217, 0
    %s220 = sadd.s32 %s219, 1
    %s221 = scalar_select %p218, %s219, %s220
    %p224 = pneg %p218
    %p225 = scmp.eq.s32.totalorder %s15, 1
    %p226 = por %p224, %p225
    %p227 = scmp.ne.s32.totalorder %s219, %s222
    %p228 = scmp.eq.s32.totalorder %s15, 0
    %p229 = por %p227, %p228
    %p230 = scmp.ne.s32.totalorder %s219, %s222
    %p231 = scmp.eq.s32.totalorder %s20, 1
    %p232 = por %p230, %p231
    %p233 = scmp.ne.s32.totalorder %s222, %s223
    %p234 = scmp.eq.s32.totalorder %s20, 0
    %p235 = por %p233, %p234
    %p236 = scmp.ne.s32.totalorder %s222, %s223
    %p237 = scmp.eq.s32.totalorder %s21, 1
    %p238 = por %p236, %p237
    %p240 = scmp.ne.s32.totalorder %s223, %s239
    %p241 = scmp.eq.s32.totalorder %s21, 0
    %p242 = por %p240, %p241
    %p243 = scmp.le.s32.totalorder 1, %s15
    %p244 = scmp.lt.s32.totalorder %s15, 3
    %p245 = pnand %p243, %p244
    %p246 = pneg %p245
    // Predicated region
    $region9: #{feedforward_gate_i.1} parent=5 // pred_check
      _
    $region10: #{feedforward_gate_i.1} parent=5 // pred_check_branch
      %248 = sbr.rel (%p245) target = $region12
    $region11: #{feedforward_gate_i.1} parent=5 // pred_region
      %s249 = ssub.s32 %s15, 1
      // Predicated region
      $region13: #{feedforward_gate_i.1} parent=11 // pred_check
        %p250 = pneg %p62
      $region14: #{feedforward_gate_i.1} parent=11 // pred_check_branch
        %252 = sbr.rel (%p250) target = $region16
      $region15: #{feedforward_gate_i.1} parent=11 // pred_region
        _
      $region16: #{feedforward_gate_i.1} parent=11 // pred_fallthru
        _
      // Predicated region
      $region17: #{feedforward_gate_i.1} parent=11 // pred_check
        %p253 = pneg %p83
      $region18: #{feedforward_gate_i.1} parent=11 // pred_check_branch
        %255 = sbr.rel (%p253) target = $region20
      $region19: #{feedforward_gate_i.1} parent=11 // pred_region
        _
      $region20: #{feedforward_gate_i.1} parent=11 // pred_fallthru
        _
      // Predicated region
      $region21: #{feedforward_gate_i.1} parent=11 // pred_check
        %p256 = pneg %p104
      $region22: #{feedforward_gate_i.1} parent=11 // pred_check_branch
        %258 = sbr.rel (%p256) target = $region24
      $region23: #{feedforward_gate_i.1} parent=11 // pred_region
        _
      $region24: #{feedforward_gate_i.1} parent=11 // pred_fallthru
        _
      // Predicated region
      $region25: #{feedforward_gate_i.1} parent=11 // pred_check
        %p259 = pneg %p125
      $region26: #{feedforward_gate_i.1} parent=11 // pred_check_branch
        %261 = sbr.rel (%p259) target = $region28
      $region27: #{feedforward_gate_i.1} parent=11 // pred_region
        _
      $region28: #{feedforward_gate_i.1} parent=11 // pred_fallthru
        _
      // Predicated region
      $region29: #{feedforward_gate_i.1} parent=11 // pred_check
        %p262 = pneg %p146
      $region30: #{feedforward_gate_i.1} parent=11 // pred_check_branch
        %264 = sbr.rel (%p262) target = $region32
      $region31: #{feedforward_gate_i.1} parent=11 // pred_region
        _
      $region32: #{feedforward_gate_i.1} parent=11 // pred_fallthru
        _
      // Predicated region
      $region33: #{feedforward_gate_i.1} parent=11 // pred_check
        %p265 = pneg %p167
      $region34: #{feedforward_gate_i.1} parent=11 // pred_check_branch
        %267 = sbr.rel (%p265) target = $region36
      $region35: #{feedforward_gate_i.1} parent=11 // pred_region
        _
      $region36: #{feedforward_gate_i.1} parent=11 // pred_fallthru
        _
      // Predicated region
      $region37: #{feedforward_gate_i.1} parent=11 // pred_check
        %p268 = pneg %p188
      $region38: #{feedforward_gate_i.1} parent=11 // pred_check_branch
        %270 = sbr.rel (%p268) target = $region40
      $region39: #{feedforward_gate_i.1} parent=11 // pred_region
        _
      $region40: #{feedforward_gate_i.1} parent=11 // pred_fallthru
        _
      // Predicated region
      $region41: #{feedforward_gate_i.1} parent=11 // pred_check
        %p271 = pneg %p209
      $region42: #{feedforward_gate_i.1} parent=11 // pred_check_branch
        %273 = sbr.rel (%p271) target = $region44
      $region43: #{feedforward_gate_i.1} parent=11 // pred_region
        _
      $region44: #{feedforward_gate_i.1} parent=11 // pred_fallthru
        _
    $region12: #{feedforward_gate_i.1} parent=5 // pred_fallthru
      _
    %p274 = scmp.lt.s32.totalorder %s15, 2
    // Predicated region
    $region45: #{feedforward_gate_i.1} parent=5 // pred_check
      %p275 = pneg %p274
    $region46: #{feedforward_gate_i.1} parent=5 // pred_check_branch
      %277 = sbr.rel (%p275) target = $region48
    $region47: #{feedforward_gate_i.1} parent=5 // pred_region
      // Predicated region
      $region49: #{feedforward_gate_i.1} parent=47 // pred_check
        %p278 = pneg %p35
      $region50: #{feedforward_gate_i.1} parent=47 // pred_check_branch
        %280 = sbr.rel (%p278) target = $region52
      $region51: #{feedforward_gate_i.1} parent=47 // pred_region
        %p281 = scmp.lt.s32.totalorder %s15, 1
        %s282 = scalar_select %p281, %s15, 1
        %s283 = smul.addr %s282, 4
        %s284 = smul.addr %s283, 8
        %s285 = scalar_lea.vmem %s0, %s284
      $region52: #{feedforward_gate_i.1} parent=47 // pred_fallthru
        _
    $region48: #{feedforward_gate_i.1} parent=5 // pred_fallthru
      _
    %p286 = scmp.le.s32.totalorder 1, %s15
    %p287 = scmp.lt.s32.totalorder %s15, 3
    %p288 = pnand %p286, %p287
    %p289 = pneg %p288
    // Predicated region
    $region53: #{feedforward_gate_i.1} parent=5 // pred_check
      _
    $region54: #{feedforward_gate_i.1} parent=5 // pred_check_branch
      %291 = sbr.rel (%p288) target = $region56
    $region55: #{feedforward_gate_i.1} parent=5 // pred_region
      %s292 = ssub.s32 %s15, 1
      %p293 = scmp.lt.s32.totalorder %s20, 1
      %s294 = scalar_select %p293, %s20, 1
      %s295 = smul.addr %s294, 4
      %s296 = smul.addr %s295, 8
      %s297 = scalar_lea.vmem %s0, %s296
      %p298 = pneg %p41
      %p299 = pneg %p38
      %p300 = pneg %p62
      %p301 = pneg %p59
      %p302 = pneg %p83
      %p303 = pneg %p80
      %p304 = pneg %p104
      %p305 = pneg %p101
      %p306 = pneg %p125
      %p307 = pneg %p122
      %p308 = pneg %p146
      %p309 = pneg %p143
      %p310 = pneg %p167
      %p311 = pneg %p164
      %p312 = pneg %p188
      %p313 = pneg %p185
      %p314 = pneg %p209
      %p315 = pneg %p206
      %p316 = pneg %p235
      %p317 = pneg %p232
      %p318 = scmp.lt.s32.totalorder %s20, 1
      %s319 = scalar_select %p318, %s20, 1
      %s320 = scalar_lea.vmem %s9, %s319
      %p321 = scmp.lt.s32.totalorder %s20, 1
      %s322 = scalar_select %p321, %s20, 1
      %s323 = smul.addr %s322, 4
      %s324 = smul.addr %s323, 8
      %s325 = scalar_lea.vmem %s0, %s324
      %p326 = scmp.lt.s32.totalorder %s20, 1
      %s327 = scalar_select %p326, %s20, 1
      %s328 = scalar_lea.vmem %s9, %s327
      %v329 = vld [vmem:[%s325] sm:$0xff]
      %v330 = vld [vmem:[%s325 + $0x8] sm:$0xff]
      %v331 = vld [vmem:[%s325 + $0x10] sm:$0xff]
      %v332 = vld [vmem:[%s325 + $0x18] sm:$0xff]
      %337 = vrot.lane.b32.xlu0 %v329, 127
      %v338 = vpop.permute.xlu0 %337
      %339 = vrot.lane.b32.xlu0 %v330, 127
      %v340 = vpop.permute.xlu0 %339
      %341 = vrot.lane.b32.xlu0 %v331, 127
      %v342 = vpop.permute.xlu0 %341
      %343 = vrot.lane.b32.xlu0 %v332, 127
      %v344 = vpop.permute.xlu0 %343
      %vm345 = vcmask 1039360
      %v346 = vsel %vm345, %v338, %v340
      %v347 = vsel %vm345, %v342, %v344
      %v354 = vsel %vm345, %v340, %v338
      %v355 = vsel %vm345, %v344, %v342
      %v356 = vmax.f32 %v329, %v346
      %v357 = vmax.f32 %v330, %v354
      %v358 = vmax.f32 %v331, %v347
      %v359 = vmax.f32 %v332, %v355
      %360 = vrot.lane.b32.xlu0 %v329, 112
      %v361 = vpop.permute.xlu0 %360
      %362 = vrot.lane.b32.xlu0 %v330, 112
      %v363 = vpop.permute.xlu0 %362
      %364 = vrot.lane.b32.xlu0 %v331, 112
      %v365 = vpop.permute.xlu0 %364
      %366 = vrot.lane.b32.xlu0 %v332, 112
      %v367 = vpop.permute.xlu0 %366
      %vm368 = vcmask 916480
      %v369 = vsel %vm368, %v361, %v363
      %v370 = vsel %vm368, %v365, %v367
      %v377 = vsel %vm368, %v363, %v361
      %v378 = vsel %vm368, %v367, %v365
      %379 = vrot.lane.b32.xlu0 %v329, 111
      %v380 = vpop.permute.xlu0 %379
      %381 = vrot.lane.b32.xlu0 %v330, 111
      %v382 = vpop.permute.xlu0 %381
      %383 = vrot.lane.b32.xlu0 %v331, 111
      %v384 = vpop.permute.xlu0 %383
      %385 = vrot.lane.b32.xlu0 %v332, 111
      %v386 = vpop.permute.xlu0 %385
      %vm387 = vcmask 908288
      %v388 = vsel %vm387, %v380, %v382
      %v389 = vsel %vm387, %v384, %v386
      %v396 = vsel %vm387, %v382, %v380
      %v397 = vsel %vm387, %v386, %v384
      %v398 = vmax.f32 %v369, %v388
      %v399 = vmax.f32 %v377, %v396
      %v400 = vmax.f32 %v370, %v389
      %v401 = vmax.f32 %v378, %v397
      %v402 = vmax.f32 %v356, %v398
      %v403 = vmax.f32 %v357, %v399
      %v404 = vmax.f32 %v358, %v400
      %v405 = vmax.f32 %v359, %v401
      %v406 = vld [vmem:[%s3] sm:$0xff]
      %v407 = vld [vmem:[%s3 + $0x8] sm:$0xff]
      %410 = vrot.lane.b32.xlu0 %v403, 34
      %v411 = vpop.permute.xlu0 %410
      %412 = vrot.lane.b32.xlu0 %v405, 34
      %v413 = vpop.permute.xlu0 %412
      %418 = vrot.lane.b32.xlu0 %v402, 34
      %v419 = vpop.permute.xlu0 %418
      %420 = vrot.lane.b32.xlu0 %v404, 34
      %v421 = vpop.permute.xlu0 %420
      %vm422 = vcmask 277504
      %v423 = vsel %vm422, %v419, %v411
      %v424 = vsel %vm422, %v421, %v413
      %v429 = vsel %vm422, %v411, %v419
      %v430 = vsel %vm422, %v413, %v421
      %v431 = vld [vmem:[%s1] sm:$0x3]
      %v433 = vperm.slane %v431, 0
      %v434 = vperm.slane %v431, 1
      %v437 = vmul.f32 %v429, %v433
      %v438 = vmul.f32 %v423, %v434
      %v439 = vmul.f32 %v430, %v433
      %v440 = vmul.f32 %v424, %v434
      %v441 = vld [vmem:[%s2] sm:$0xff]
      %v442 = vld [vmem:[%s2 + $0x8] sm:$0xff]
      %443 = vrot.lane.b32.xlu0 %v403, 32
      %v444 = vpop.permute.xlu0 %443
      %445 = vrot.lane.b32.xlu0 %v405, 32
      %v446 = vpop.permute.xlu0 %445
      %449 = vrot.lane.b32.xlu0 %v402, 32
      %v450 = vpop.permute.xlu0 %449
      %451 = vrot.lane.b32.xlu0 %v404, 32
      %v452 = vpop.permute.xlu0 %451
      %vm453 = vcmask 261120
      %v454 = vsel %vm453, %v450, %v444
      %v455 = vsel %vm453, %v452, %v446
      %v460 = vsel %vm453, %v444, %v450
      %v461 = vsel %vm453, %v446, %v452
      %s462 = scalar_lea.vmem %s1, 2
      %v463 = vld [vmem:[%s462] sm:$0x3]
      %v465 = vperm.slane %v463, 0
      %v466 = vperm.slane %v463, 1
      %v469 = vmul.f32 %v460, %v465
      %v470 = vmul.f32 %v454, %v466
      %v471 = vmul.f32 %v461, %v465
      %v472 = vmul.f32 %v455, %v466
      %s473 = scalar_lea.vmem %s2, 16
      %v474 = vld [vmem:[%s473] sm:$0xff]
      %v475 = vld [vmem:[%s473 + $0x8] sm:$0xff]
      %vm476 = vcmask 130048
      %v478 = vsel %vm476, %v474, 0
      %v481 = vsel %vm476, %v475, 0
      %483 = vmatpush.msra.mxu0 0.0
      %484 = vmatpush.msra.mxu0 0.0
      %485 = vmatpush.msra.mxu0 0.0
      %486 = vmatpush.msra.mxu0 0.0
      %487 = vmatpush.msra.mxu0 0.0
      %488 = vmatpush.msra.mxu0 0.0
      %489 = vmatpush.msra.mxu0 0.0
      %490 = vmatpush.msra.mxu0 0.0
      %491 = vmatpush.msra.mxu0 0.0
      %492 = vmatpush.msra.mxu0 0.0
      %493 = vmatpush.msra.mxu0 0.0
      %494 = vmatpush.msra.mxu0 0.0
      %495 = vmatpush.msra.mxu0 0.0
      %496 = vmatpush.msra.mxu0 0.0
      %497 = vmatpush.msra.mxu0 %v471
      %498 = vmatpush.msra.mxu0 %v469
      %499 = vmatmul.f32.gmra.mxu0 %v478
      %v500 = vpop.f32.mrf.mxu0
      %v501 = vadd.f32 0.0, %v500
      %502 = vmatmul.f32.gmra.mxu0 %v481
      %v503 = vpop.f32.mrf.mxu0
      %v504 = vadd.f32 0.0, %v503
      %505 = vdwg.mxu0
      %506 = vmatpush.msra.mxu0 0.0
      %507 = vmatpush.msra.mxu0 0.0
      %508 = vmatpush.msra.mxu0 0.0
      %509 = vmatpush.msra.mxu0 0.0
      %510 = vmatpush.msra.mxu0 0.0
      %511 = vmatpush.msra.mxu0 0.0
      %512 = vmatpush.msra.mxu0 0.0
      %513 = vmatpush.msra.mxu0 0.0
      %514 = vmatpush.msra.mxu0 0.0
      %515 = vmatpush.msra.mxu0 0.0
      %516 = vmatpush.msra.mxu0 0.0
      %517 = vmatpush.msra.mxu0 0.0
      %518 = vmatpush.msra.mxu0 0.0
      %519 = vmatpush.msra.mxu0 0.0
      %520 = vmatpush.msra.mxu0 %v472
      %521 = vmatpush.msra.mxu0 %v470
      %522 = vmatmul.f32.gmra.mxu0 %v478
      %v523 = vpop.f32.mrf.mxu0
      %v524 = vadd.f32 0.0, %v523
      %525 = vmatmul.f32.gmra.mxu0 %v481
      %v526 = vpop.f32.mrf.mxu0
      %v527 = vadd.f32 0.0, %v526
      %528 = vdwg.mxu0
      %v530 = vsel %vm476, %v441, 0
      %v533 = vsel %vm476, %v442, 0
      %535 = vmatpush.msra.mxu0 0.0
      %536 = vmatpush.msra.mxu0 0.0
      %537 = vmatpush.msra.mxu0 0.0
      %538 = vmatpush.msra.mxu0 0.0
      %539 = vmatpush.msra.mxu0 0.0
      %540 = vmatpush.msra.mxu0 0.0
      %541 = vmatpush.msra.mxu0 0.0
      %542 = vmatpush.msra.mxu0 0.0
      %543 = vmatpush.msra.mxu0 0.0
      %544 = vmatpush.msra.mxu0 0.0
      %545 = vmatpush.msra.mxu0 0.0
      %546 = vmatpush.msra.mxu0 0.0
      %547 = vmatpush.msra.mxu0 0.0
      %548 = vmatpush.msra.mxu0 0.0
      %549 = vmatpush.msra.mxu0 %v439
      %550 = vmatpush.msra.mxu0 %v437
      %551 = vmatmul.f32.gmra.mxu0 %v530
      %v552 = vpop.f32.mrf.mxu0
      %v553 = vadd.f32 %v501, %v552
      %554 = vmatmul.f32.gmra.mxu0 %v533
      %v555 = vpop.f32.mrf.mxu0
      %v556 = vadd.f32 %v504, %v555
      %557 = vdwg.mxu0
      %558 = vmatpush.msra.mxu0 0.0
      %559 = vmatpush.msra.mxu0 0.0
      %560 = vmatpush.msra.mxu0 0.0
      %561 = vmatpush.msra.mxu0 0.0
      %562 = vmatpush.msra.mxu0 0.0
      %563 = vmatpush.msra.mxu0 0.0
      %564 = vmatpush.msra.mxu0 0.0
      %565 = vmatpush.msra.mxu0 0.0
      %566 = vmatpush.msra.mxu0 0.0
      %567 = vmatpush.msra.mxu0 0.0
      %568 = vmatpush.msra.mxu0 0.0
      %569 = vmatpush.msra.mxu0 0.0
      %570 = vmatpush.msra.mxu0 0.0
      %571 = vmatpush.msra.mxu0 0.0
      %572 = vmatpush.msra.mxu0 %v440
      %573 = vmatpush.msra.mxu0 %v438
      %574 = vmatmul.f32.gmra.mxu0 %v530
      %v575 = vpop.f32.mrf.mxu0
      %v576 = vadd.f32 %v524, %v575
      %577 = vmatmul.f32.gmra.mxu0 %v533
      %v578 = vpop.f32.mrf.mxu0
      %v579 = vadd.f32 %v527, %v578
      %580 = vdwg.mxu0
      %581 = vrot.lane.b32.xlu0 %v403, 30
      %v582 = vpop.permute.xlu0 %581
      %583 = vrot.lane.b32.xlu0 %v405, 30
      %v584 = vpop.permute.xlu0 %583
      %587 = vrot.lane.b32.xlu0 %v402, 30
      %v588 = vpop.permute.xlu0 %587
      %589 = vrot.lane.b32.xlu0 %v404, 30
      %v590 = vpop.permute.xlu0 %589
      %vm591 = vcmask 244736
      %v592 = vsel %vm591, %v588, %v582
      %v593 = vsel %vm591, %v590, %v584
      %v598 = vsel %vm591, %v582, %v588
      %v599 = vsel %vm591, %v584, %v590
      %s600 = scalar_lea.vmem %s1, 4
      %v601 = vld [vmem:[%s600] sm:$0x3]
      %v603 = vperm.slane %v601, 0
      %v604 = vperm.slane %v601, 1
      %v607 = vmul.f32 %v598, %v603
      %v608 = vmul.f32 %v592, %v604
      %v609 = vmul.f32 %v599, %v603
      %v610 = vmul.f32 %v593, %v604
      %s611 = scalar_lea.vmem %s2, 32
      %v612 = vld [vmem:[%s611] sm:$0xff]
      %v613 = vld [vmem:[%s611 + $0x8] sm:$0xff]
      %v615 = vsel %vm476, %v612, 0
      %v618 = vsel %vm476, %v613, 0
      %620 = vmatpush.msra.mxu0 0.0
      %621 = vmatpush.msra.mxu0 0.0
      %622 = vmatpush.msra.mxu0 0.0
      %623 = vmatpush.msra.mxu0 0.0
      %624 = vmatpush.msra.mxu0 0.0
      %625 = vmatpush.msra.mxu0 0.0
      %626 = vmatpush.msra.mxu0 0.0
      %627 = vmatpush.msra.mxu0 0.0
      %628 = vmatpush.msra.mxu0 0.0
      %629 = vmatpush.msra.mxu0 0.0
      %630 = vmatpush.msra.mxu0 0.0
      %631 = vmatpush.msra.mxu0 0.0
      %632 = vmatpush.msra.mxu0 0.0
      %633 = vmatpush.msra.mxu0 0.0
      %634 = vmatpush.msra.mxu0 %v609
      %635 = vmatpush.msra.mxu0 %v607
      %636 = vmatmul.f32.gmra.mxu0 %v615
      %v637 = vpop.f32.mrf.mxu0
      %v638 = vadd.f32 0.0, %v637
      %639 = vmatmul.f32.gmra.mxu0 %v618
      %v640 = vpop.f32.mrf.mxu0
      %v641 = vadd.f32 0.0, %v640
      %642 = vdwg.mxu0
      %643 = vmatpush.msra.mxu0 0.0
      %644 = vmatpush.msra.mxu0 0.0
      %645 = vmatpush.msra.mxu0 0.0
      %646 = vmatpush.msra.mxu0 0.0
      %647 = vmatpush.msra.mxu0 0.0
      %648 = vmatpush.msra.mxu0 0.0
      %649 = vmatpush.msra.mxu0 0.0
      %650 = vmatpush.msra.mxu0 0.0
      %651 = vmatpush.msra.mxu0 0.0
      %652 = vmatpush.msra.mxu0 0.0
      %653 = vmatpush.msra.mxu0 0.0
      %654 = vmatpush.msra.mxu0 0.0
      %655 = vmatpush.msra.mxu0 0.0
      %656 = vmatpush.msra.mxu0 0.0
      %657 = vmatpush.msra.mxu0 %v610
      %658 = vmatpush.msra.mxu0 %v608
      %659 = vmatmul.f32.gmra.mxu0 %v615
      %v660 = vpop.f32.mrf.mxu0
      %v661 = vadd.f32 0.0, %v660
      %662 = vmatmul.f32.gmra.mxu0 %v618
      %v663 = vpop.f32.mrf.mxu0
      %v664 = vadd.f32 0.0, %v663
      %665 = vdwg.mxu0
      %v666 = vadd.f32 %v553, %v638
      %v667 = vadd.f32 %v576, %v661
      %v668 = vadd.f32 %v556, %v641
      %v669 = vadd.f32 %v579, %v664
      %670 = vrot.lane.b32.xlu0 %v403, 2
      %v671 = vpop.permute.xlu0 %670
      %672 = vrot.lane.b32.xlu0 %v405, 2
      %v673 = vpop.permute.xlu0 %672
      %676 = vrot.lane.b32.xlu0 %v402, 2
      %v677 = vpop.permute.xlu0 %676
      %678 = vrot.lane.b32.xlu0 %v404, 2
      %v679 = vpop.permute.xlu0 %678
      %vm680 = vcmask 15360
      %v681 = vsel %vm680, %v677, %v671
      %v682 = vsel %vm680, %v679, %v673
      %v687 = vsel %vm680, %v671, %v677
      %v688 = vsel %vm680, %v673, %v679
      %s689 = scalar_lea.vmem %s1, 6
      %v690 = vld [vmem:[%s689] sm:$0x3]
      %v692 = vperm.slane %v690, 0
      %v693 = vperm.slane %v690, 1
      %v696 = vmul.f32 %v687, %v692
      %v697 = vmul.f32 %v681, %v693
      %v698 = vmul.f32 %v688, %v692
      %v699 = vmul.f32 %v682, %v693
      %s700 = scalar_lea.vmem %s2, 48
      %v701 = vld [vmem:[%s700] sm:$0xff]
      %v702 = vld [vmem:[%s700 + $0x8] sm:$0xff]
      %v704 = vsel %vm476, %v701, 0
      %v707 = vsel %vm476, %v702, 0
      %709 = vmatpush.msra.mxu0 0.0
      %710 = vmatpush.msra.mxu0 0.0
      %711 = vmatpush.msra.mxu0 0.0
      %712 = vmatpush.msra.mxu0 0.0
      %713 = vmatpush.msra.mxu0 0.0
      %714 = vmatpush.msra.mxu0 0.0
      %715 = vmatpush.msra.mxu0 0.0
      %716 = vmatpush.msra.mxu0 0.0
      %717 = vmatpush.msra.mxu0 0.0
      %718 = vmatpush.msra.mxu0 0.0
      %719 = vmatpush.msra.mxu0 0.0
      %720 = vmatpush.msra.mxu0 0.0
      %721 = vmatpush.msra.mxu0 0.0
      %722 = vmatpush.msra.mxu0 0.0
      %723 = vmatpush.msra.mxu0 %v698
      %724 = vmatpush.msra.mxu0 %v696
      %725 = vmatmul.f32.gmra.mxu0 %v704
      %v726 = vpop.f32.mrf.mxu0
      %v727 = vadd.f32 0.0, %v726
      %728 = vmatmul.f32.gmra.mxu0 %v707
      %v729 = vpop.f32.mrf.mxu0
      %v730 = vadd.f32 0.0, %v729
      %731 = vdwg.mxu0
      %732 = vmatpush.msra.mxu0 0.0
      %733 = vmatpush.msra.mxu0 0.0
      %734 = vmatpush.msra.mxu0 0.0
      %735 = vmatpush.msra.mxu0 0.0
      %736 = vmatpush.msra.mxu0 0.0
      %737 = vmatpush.msra.mxu0 0.0
      %738 = vmatpush.msra.mxu0 0.0
      %739 = vmatpush.msra.mxu0 0.0
      %740 = vmatpush.msra.mxu0 0.0
      %741 = vmatpush.msra.mxu0 0.0
      %742 = vmatpush.msra.mxu0 0.0
      %743 = vmatpush.msra.mxu0 0.0
      %744 = vmatpush.msra.mxu0 0.0
      %745 = vmatpush.msra.mxu0 0.0
      %746 = vmatpush.msra.mxu0 %v699
      %747 = vmatpush.msra.mxu0 %v697
      %748 = vmatmul.f32.gmra.mxu0 %v704
      %v749 = vpop.f32.mrf.mxu0
      %v750 = vadd.f32 0.0, %v749
      %751 = vmatmul.f32.gmra.mxu0 %v707
      %v752 = vpop.f32.mrf.mxu0
      %v753 = vadd.f32 0.0, %v752
      %754 = vdwg.mxu0
      %v755 = vadd.f32 %v666, %v727
      %v756 = vadd.f32 %v667, %v750
      %v757 = vadd.f32 %v668, %v730
      %v758 = vadd.f32 %v669, %v753
      %s759 = scalar_lea.vmem %s1, 8
      %v760 = vld [vmem:[%s759] sm:$0x3]
      %v762 = vperm.slane %v760, 0
      %v763 = vperm.slane %v760, 1
      %v766 = vmul.f32 %v402, %v762
      %v767 = vmul.f32 %v403, %v763
      %v768 = vmul.f32 %v404, %v762
      %v769 = vmul.f32 %v405, %v763
      %s770 = scalar_lea.vmem %s2, 64
      %v771 = vld [vmem:[%s770] sm:$0xff]
      %v772 = vld [vmem:[%s770 + $0x8] sm:$0xff]
      %v774 = vsel %vm476, %v771, 0
      %v777 = vsel %vm476, %v772, 0
      %779 = vmatpush.msra.mxu0 0.0
      %780 = vmatpush.msra.mxu0 0.0
      %781 = vmatpush.msra.mxu0 0.0
      %782 = vmatpush.msra.mxu0 0.0
      %783 = vmatpush.msra.mxu0 0.0
      %784 = vmatpush.msra.mxu0 0.0
      %785 = vmatpush.msra.mxu0 0.0
      %786 = vmatpush.msra.mxu0 0.0
      %787 = vmatpush.msra.mxu0 0.0
      %788 = vmatpush.msra.mxu0 0.0
      %789 = vmatpush.msra.mxu0 0.0
      %790 = vmatpush.msra.mxu0 0.0
      %791 = vmatpush.msra.mxu0 0.0
      %792 = vmatpush.msra.mxu0 0.0
      %793 = vmatpush.msra.mxu0 %v768
      %794 = vmatpush.msra.mxu0 %v766
      %795 = vmatmul.f32.gmra.mxu0 %v774
      %v796 = vpop.f32.mrf.mxu0
      %v797 = vadd.f32 0.0, %v796
      %798 = vmatmul.f32.gmra.mxu0 %v777
      %v799 = vpop.f32.mrf.mxu0
      %v800 = vadd.f32 0.0, %v799
      %801 = vdwg.mxu0
      %802 = vmatpush.msra.mxu0 0.0
      %803 = vmatpush.msra.mxu0 0.0
      %804 = vmatpush.msra.mxu0 0.0
      %805 = vmatpush.msra.mxu0 0.0
      %806 = vmatpush.msra.mxu0 0.0
      %807 = vmatpush.msra.mxu0 0.0
      %808 = vmatpush.msra.mxu0 0.0
      %809 = vmatpush.msra.mxu0 0.0
      %810 = vmatpush.msra.mxu0 0.0
      %811 = vmatpush.msra.mxu0 0.0
      %812 = vmatpush.msra.mxu0 0.0
      %813 = vmatpush.msra.mxu0 0.0
      %814 = vmatpush.msra.mxu0 0.0
      %815 = vmatpush.msra.mxu0 0.0
      %816 = vmatpush.msra.mxu0 %v769
      %817 = vmatpush.msra.mxu0 %v767
      %818 = vmatmul.f32.gmra.mxu0 %v774
      %v819 = vpop.f32.mrf.mxu0
      %v820 = vadd.f32 0.0, %v819
      %821 = vmatmul.f32.gmra.mxu0 %v777
      %v822 = vpop.f32.mrf.mxu0
      %v823 = vadd.f32 0.0, %v822
      %824 = vdwg.mxu0
      %v825 = vadd.f32 %v755, %v797
      %v826 = vadd.f32 %v756, %v820
      %v827 = vadd.f32 %v757, %v800
      %v828 = vadd.f32 %v758, %v823
      %829 = vrot.lane.b32.xlu0 %v402, 126
      %v830 = vpop.permute.xlu0 %829
      %831 = vrot.lane.b32.xlu0 %v403, 126
      %v832 = vpop.permute.xlu0 %831
      %833 = vrot.lane.b32.xlu0 %v404, 126
      %v834 = vpop.permute.xlu0 %833
      %835 = vrot.lane.b32.xlu0 %v405, 126
      %v836 = vpop.permute.xlu0 %835
      %vm837 = vcmask 1031168
      %v838 = vsel %vm837, %v830, %v832
      %v839 = vsel %vm837, %v834, %v836
      %v846 = vsel %vm837, %v832, %v830
      %v847 = vsel %vm837, %v836, %v834
      %s848 = scalar_lea.vmem %s1, 10
      %v849 = vld [vmem:[%s848] sm:$0x3]
      %v851 = vperm.slane %v849, 0
      %v852 = vperm.slane %v849, 1
      %v855 = vmul.f32 %v838, %v851
      %v856 = vmul.f32 %v846, %v852
      %v857 = vmul.f32 %v839, %v851
      %v858 = vmul.f32 %v847, %v852
      %s859 = scalar_lea.vmem %s2, 80
      %v860 = vld [vmem:[%s859] sm:$0xff]
      %v861 = vld [vmem:[%s859 + $0x8] sm:$0xff]
      %v863 = vsel %vm476, %v860, 0
      %v866 = vsel %vm476, %v861, 0
      %868 = vmatpush.msra.mxu0 0.0
      %869 = vmatpush.msra.mxu0 0.0
      %870 = vmatpush.msra.mxu0 0.0
      %871 = vmatpush.msra.mxu0 0.0
      %872 = vmatpush.msra.mxu0 0.0
      %873 = vmatpush.msra.mxu0 0.0
      %874 = vmatpush.msra.mxu0 0.0
      %875 = vmatpush.msra.mxu0 0.0
      %876 = vmatpush.msra.mxu0 0.0
      %877 = vmatpush.msra.mxu0 0.0
      %878 = vmatpush.msra.mxu0 0.0
      %879 = vmatpush.msra.mxu0 0.0
      %880 = vmatpush.msra.mxu0 0.0
      %881 = vmatpush.msra.mxu0 0.0
      %882 = vmatpush.msra.mxu0 %v857
      %883 = vmatpush.msra.mxu0 %v855
      %884 = vmatmul.f32.gmra.mxu0 %v863
      %v885 = vpop.f32.mrf.mxu0
      %v886 = vadd.f32 0.0, %v885
      %887 = vmatmul.f32.gmra.mxu0 %v866
      %v888 = vpop.f32.mrf.mxu0
      %v889 = vadd.f32 0.0, %v888
      %890 = vdwg.mxu0
      %891 = vmatpush.msra.mxu0 0.0
      %892 = vmatpush.msra.mxu0 0.0
      %893 = vmatpush.msra.mxu0 0.0
      %894 = vmatpush.msra.mxu0 0.0
      %895 = vmatpush.msra.mxu0 0.0
      %896 = vmatpush.msra.mxu0 0.0
      %897 = vmatpush.msra.mxu0 0.0
      %898 = vmatpush.msra.mxu0 0.0
      %899 = vmatpush.msra.mxu0 0.0
      %900 = vmatpush.msra.mxu0 0.0
      %901 = vmatpush.msra.mxu0 0.0
      %902 = vmatpush.msra.mxu0 0.0
      %903 = vmatpush.msra.mxu0 0.0
      %904 = vmatpush.msra.mxu0 0.0
      %905 = vmatpush.msra.mxu0 %v858
      %906 = vmatpush.msra.mxu0 %v856
      %907 = vmatmul.f32.gmra.mxu0 %v863
      %v908 = vpop.f32.mrf.mxu0
      %v909 = vadd.f32 0.0, %v908
      %910 = vmatmul.f32.gmra.mxu0 %v866
      %v911 = vpop.f32.mrf.mxu0
      %v912 = vadd.f32 0.0, %v911
      %913 = vdwg.mxu0
      %v914 = vadd.f32 %v825, %v886
      %v915 = vadd.f32 %v826, %v909
      %v916 = vadd.f32 %v827, %v889
      %v917 = vadd.f32 %v828, %v912
      %918 = vrot.lane.b32.xlu0 %v402, 98
      %v919 = vpop.permute.xlu0 %918
      %920 = vrot.lane.b32.xlu0 %v403, 98
      %v921 = vpop.permute.xlu0 %920
      %922 = vrot.lane.b32.xlu0 %v404, 98
      %v923 = vpop.permute.xlu0 %922
      %924 = vrot.lane.b32.xlu0 %v405, 98
      %v925 = vpop.permute.xlu0 %924
      %vm926 = vcmask 801792
      %v927 = vsel %vm926, %v919, %v921
      %v928 = vsel %vm926, %v923, %v925
      %v935 = vsel %vm926, %v921, %v919
      %v936 = vsel %vm926, %v925, %v923
      %s937 = scalar_lea.vmem %s1, 12
      %v938 = vld [vmem:[%s937] sm:$0x3]
      %v940 = vperm.slane %v938, 0
      %v941 = vperm.slane %v938, 1
      %v944 = vmul.f32 %v927, %v940
      %v945 = vmul.f32 %v935, %v941
      %v946 = vmul.f32 %v928, %v940
      %v947 = vmul.f32 %v936, %v941
      %s948 = scalar_lea.vmem %s2, 96
      %v949 = vld [vmem:[%s948] sm:$0xff]
      %v950 = vld [vmem:[%s948 + $0x8] sm:$0xff]
      %v952 = vsel %vm476, %v949, 0
      %v955 = vsel %vm476, %v950, 0
      %957 = vmatpush.msra.mxu0 0.0
      %958 = vmatpush.msra.mxu0 0.0
      %959 = vmatpush.msra.mxu0 0.0
      %960 = vmatpush.msra.mxu0 0.0
      %961 = vmatpush.msra.mxu0 0.0
      %962 = vmatpush.msra.mxu0 0.0
      %963 = vmatpush.msra.mxu0 0.0
      %964 = vmatpush.msra.mxu0 0.0
      %965 = vmatpush.msra.mxu0 0.0
      %966 = vmatpush.msra.mxu0 0.0
      %967 = vmatpush.msra.mxu0 0.0
      %968 = vmatpush.msra.mxu0 0.0
      %969 = vmatpush.msra.mxu0 0.0
      %970 = vmatpush.msra.mxu0 0.0
      %971 = vmatpush.msra.mxu0 %v946
      %972 = vmatpush.msra.mxu0 %v944
      %973 = vmatmul.f32.gmra.mxu0 %v952
      %v974 = vpop.f32.mrf.mxu0
      %v975 = vadd.f32 0.0, %v974
      %976 = vmatmul.f32.gmra.mxu0 %v955
      %v977 = vpop.f32.mrf.mxu0
      %v978 = vadd.f32 0.0, %v977
      %979 = vdwg.mxu0
      %980 = vmatpush.msra.mxu0 0.0
      %981 = vmatpush.msra.mxu0 0.0
      %982 = vmatpush.msra.mxu0 0.0
      %983 = vmatpush.msra.mxu0 0.0
      %984 = vmatpush.msra.mxu0 0.0
      %985 = vmatpush.msra.mxu0 0.0
      %986 = vmatpush.msra.mxu0 0.0
      %987 = vmatpush.msra.mxu0 0.0
      %988 = vmatpush.msra.mxu0 0.0
      %989 = vmatpush.msra.mxu0 0.0
      %990 = vmatpush.msra.mxu0 0.0
      %991 = vmatpush.msra.mxu0 0.0
      %992 = vmatpush.msra.mxu0 0.0
      %993 = vmatpush.msra.mxu0 0.0
      %994 = vmatpush.msra.mxu0 %v947
      %995 = vmatpush.msra.mxu0 %v945
      %996 = vmatmul.f32.gmra.mxu0 %v952
      %v997 = vpop.f32.mrf.mxu0
      %v998 = vadd.f32 0.0, %v997
      %999 = vmatmul.f32.gmra.mxu0 %v955
      %v1000 = vpop.f32.mrf.mxu0
      %v1001 = vadd.f32 0.0, %v1000
      %1002 = vdwg.mxu0
      %v1003 = vadd.f32 %v914, %v975
      %v1004 = vadd.f32 %v915, %v998
      %v1005 = vadd.f32 %v916, %v978
      %v1006 = vadd.f32 %v917, %v1001
      %1007 = vrot.lane.b32.xlu0 %v402, 96
      %v1008 = vpop.permute.xlu0 %1007
      %1009 = vrot.lane.b32.xlu0 %v403, 96
      %v1010 = vpop.permute.xlu0 %1009
      %1011 = vrot.lane.b32.xlu0 %v404, 96
      %v1012 = vpop.permute.xlu0 %1011
      %1013 = vrot.lane.b32.xlu0 %v405, 96
      %v1014 = vpop.permute.xlu0 %1013
      %vm1015 = vcmask 785408
      %v1016 = vsel %vm1015, %v1008, %v1010
      %v1017 = vsel %vm1015, %v1012, %v1014
      %v1024 = vsel %vm1015, %v1010, %v1008
      %v1025 = vsel %vm1015, %v1014, %v1012
      %s1026 = scalar_lea.vmem %s1, 14
      %v1027 = vld [vmem:[%s1026] sm:$0x3]
      %v1029 = vperm.slane %v1027, 0
      %v1030 = vperm.slane %v1027, 1
      %v1033 = vmul.f32 %v1016, %v1029
      %v1034 = vmul.f32 %v1024, %v1030
      %v1035 = vmul.f32 %v1017, %v1029
      %v1036 = vmul.f32 %v1025, %v1030
      %s1037 = scalar_lea.vmem %s2, 112
      %v1038 = vld [vmem:[%s1037] sm:$0xff]
      %v1039 = vld [vmem:[%s1037 + $0x8] sm:$0xff]
      %v1041 = vsel %vm476, %v1038, 0
      %v1044 = vsel %vm476, %v1039, 0
      %1046 = vmatpush.msra.mxu0 0.0
      %1047 = vmatpush.msra.mxu0 0.0
      %1048 = vmatpush.msra.mxu0 0.0
      %1049 = vmatpush.msra.mxu0 0.0
      %1050 = vmatpush.msra.mxu0 0.0
      %1051 = vmatpush.msra.mxu0 0.0
      %1052 = vmatpush.msra.mxu0 0.0
      %1053 = vmatpush.msra.mxu0 0.0
      %1054 = vmatpush.msra.mxu0 0.0
      %1055 = vmatpush.msra.mxu0 0.0
      %1056 = vmatpush.msra.mxu0 0.0
      %1057 = vmatpush.msra.mxu0 0.0
      %1058 = vmatpush.msra.mxu0 0.0
      %1059 = vmatpush.msra.mxu0 0.0
      %1060 = vmatpush.msra.mxu0 %v1035
      %1061 = vmatpush.msra.mxu0 %v1033
      %1062 = vmatmul.f32.gmra.mxu0 %v1041
      %v1063 = vpop.f32.mrf.mxu0
      %v1064 = vadd.f32 0.0, %v1063
      %1065 = vmatmul.f32.gmra.mxu0 %v1044
      %v1066 = vpop.f32.mrf.mxu0
      %v1067 = vadd.f32 0.0, %v1066
      %1068 = vdwg.mxu0
      %1069 = vmatpush.msra.mxu0 0.0
      %1070 = vmatpush.msra.mxu0 0.0
      %1071 = vmatpush.msra.mxu0 0.0
      %1072 = vmatpush.msra.mxu0 0.0
      %1073 = vmatpush.msra.mxu0 0.0
      %1074 = vmatpush.msra.mxu0 0.0
      %1075 = vmatpush.msra.mxu0 0.0
      %1076 = vmatpush.msra.mxu0 0.0
      %1077 = vmatpush.msra.mxu0 0.0
      %1078 = vmatpush.msra.mxu0 0.0
      %1079 = vmatpush.msra.mxu0 0.0
      %1080 = vmatpush.msra.mxu0 0.0
      %1081 = vmatpush.msra.mxu0 0.0
      %1082 = vmatpush.msra.mxu0 0.0
      %1083 = vmatpush.msra.mxu0 %v1036
      %1084 = vmatpush.msra.mxu0 %v1034
      %1085 = vmatmul.f32.gmra.mxu0 %v1041
      %v1086 = vpop.f32.mrf.mxu0
      %v1087 = vadd.f32 0.0, %v1086
      %1088 = vmatmul.f32.gmra.mxu0 %v1044
      %v1089 = vpop.f32.mrf.mxu0
      %v1090 = vadd.f32 0.0, %v1089
      %1091 = vdwg.mxu0
      %v1092 = vadd.f32 %v1003, %v1064
      %v1093 = vadd.f32 %v1004, %v1087
      %v1094 = vadd.f32 %v1005, %v1067
      %v1095 = vadd.f32 %v1006, %v1090
      %1096 = vrot.lane.b32.xlu0 %v402, 94
      %v1097 = vpop.permute.xlu0 %1096
      %1098 = vrot.lane.b32.xlu0 %v403, 94
      %v1099 = vpop.permute.xlu0 %1098
      %1100 = vrot.lane.b32.xlu0 %v404, 94
      %v1101 = vpop.permute.xlu0 %1100
      %1102 = vrot.lane.b32.xlu0 %v405, 94
      %v1103 = vpop.permute.xlu0 %1102
      %vm1104 = vcmask 769024
      %v1105 = vsel %vm1104, %v1097, %v1099
      %v1106 = vsel %vm1104, %v1101, %v1103
      %v1113 = vsel %vm1104, %v1099, %v1097
      %v1114 = vsel %vm1104, %v1103, %v1101
      %s1115 = scalar_lea.vmem %s1, 16
      %v1116 = vld [vmem:[%s1115] sm:$0x3]
      %v1118 = vperm.slane %v1116, 0
      %v1119 = vperm.slane %v1116, 1
      %v1122 = vmul.f32 %v1105, %v1118
      %v1123 = vmul.f32 %v1113, %v1119
      %v1124 = vmul.f32 %v1106, %v1118
      %v1125 = vmul.f32 %v1114, %v1119
      %s1126 = scalar_lea.vmem %s2, 128
      %v1127 = vld [vmem:[%s1126] sm:$0xff]
      %v1128 = vld [vmem:[%s1126 + $0x8] sm:$0xff]
      %v1130 = vsel %vm476, %v1127, 0
      %v1133 = vsel %vm476, %v1128, 0
      %1135 = vmatpush.msra.mxu0 0.0
      %1136 = vmatpush.msra.mxu0 0.0
      %1137 = vmatpush.msra.mxu0 0.0
      %1138 = vmatpush.msra.mxu0 0.0
      %1139 = vmatpush.msra.mxu0 0.0
      %1140 = vmatpush.msra.mxu0 0.0
      %1141 = vmatpush.msra.mxu0 0.0
      %1142 = vmatpush.msra.mxu0 0.0
      %1143 = vmatpush.msra.mxu0 0.0
      %1144 = vmatpush.msra.mxu0 0.0
      %1145 = vmatpush.msra.mxu0 0.0
      %1146 = vmatpush.msra.mxu0 0.0
      %1147 = vmatpush.msra.mxu0 0.0
      %1148 = vmatpush.msra.mxu0 0.0
      %1149 = vmatpush.msra.mxu0 %v1124
      %1150 = vmatpush.msra.mxu0 %v1122
      %1151 = vmatmul.f32.gmra.mxu0 %v1130
      %v1152 = vpop.f32.mrf.mxu0
      %v1153 = vadd.f32 0.0, %v1152
      %1154 = vmatmul.f32.gmra.mxu0 %v1133
      %v1155 = vpop.f32.mrf.mxu0
      %v1156 = vadd.f32 0.0, %v1155
      %1157 = vdwg.mxu0
      %1158 = vmatpush.msra.mxu0 0.0
      %1159 = vmatpush.msra.mxu0 0.0
      %1160 = vmatpush.msra.mxu0 0.0
      %1161 = vmatpush.msra.mxu0 0.0
      %1162 = vmatpush.msra.mxu0 0.0
      %1163 = vmatpush.msra.mxu0 0.0
      %1164 = vmatpush.msra.mxu0 0.0
      %1165 = vmatpush.msra.mxu0 0.0
      %1166 = vmatpush.msra.mxu0 0.0
      %1167 = vmatpush.msra.mxu0 0.0
      %1168 = vmatpush.msra.mxu0 0.0
      %1169 = vmatpush.msra.mxu0 0.0
      %1170 = vmatpush.msra.mxu0 0.0
      %1171 = vmatpush.msra.mxu0 0.0
      %1172 = vmatpush.msra.mxu0 %v1125
      %1173 = vmatpush.msra.mxu0 %v1123
      %1174 = vmatmul.f32.gmra.mxu0 %v1130
      %v1175 = vpop.f32.mrf.mxu0
      %v1176 = vadd.f32 0.0, %v1175
      %1177 = vmatmul.f32.gmra.mxu0 %v1133
      %v1178 = vpop.f32.mrf.mxu0
      %v1179 = vadd.f32 0.0, %v1178
      %1180 = vdwg.mxu0
      %v1181 = vadd.f32 %v1092, %v1153
      %v1182 = vadd.f32 %v1093, %v1176
      %v1183 = vadd.f32 %v1094, %v1156
      %v1184 = vadd.f32 %v1095, %v1179
      %1186 = vset.pattern.permute.xlu0 0
      %1187 = vperm.xlu0 %1186, %v406
      %v1188 = vpop.permute.xlu0 %1187
      %1191 = vset.pattern.permute.xlu0 0
      %1192 = vperm.xlu0 %1191, %v407
      %v1193 = vpop.permute.xlu0 %1192
      %v1195 = vadd.f32 %v1181, %v1188
      %v1196 = vadd.f32 %v1182, %v1188
      %v1197 = vadd.f32 %v1183, %v1193
      %v1198 = vadd.f32 %v1184, %v1193
      %v1199 = vmax.f32 %v1195, 0.0
      %v1200 = vmax.f32 %v1196, 0.0
      %v1201 = vmax.f32 %v1197, 0.0
      %v1202 = vmax.f32 %v1198, 0.0
      %v1203 = vld [vmem:[%s5] sm:$0xff]
      %v1204 = vld [vmem:[%s5 + $0x8] sm:$0xff]
      %1207 = vrot.lane.b32.xlu0 %v1200, 34
      %v1208 = vpop.permute.xlu0 %1207
      %1209 = vrot.lane.b32.xlu0 %v1202, 34
      %v1210 = vpop.permute.xlu0 %1209
      %1215 = vrot.lane.b32.xlu0 %v1199, 34
      %v1216 = vpop.permute.xlu0 %1215
      %1217 = vrot.lane.b32.xlu0 %v1201, 34
      %v1218 = vpop.permute.xlu0 %1217
      %v1219 = vsel %vm422, %v1216, %v1208
      %v1220 = vsel %vm422, %v1218, %v1210
      %v1225 = vsel %vm422, %v1208, %v1216
      %v1226 = vsel %vm422, %v1210, %v1218
      %v1227 = vmul.f32 %v1225, %v433
      %v1228 = vmul.f32 %v1219, %v434
      %v1229 = vmul.f32 %v1226, %v433
      %v1230 = vmul.f32 %v1220, %v434
      %v1231 = vld [vmem:[%s4] sm:$0xff]
      %v1232 = vld [vmem:[%s4 + $0x8] sm:$0xff]
      %1233 = vrot.lane.b32.xlu0 %v1200, 32
      %v1234 = vpop.permute.xlu0 %1233
      %1235 = vrot.lane.b32.xlu0 %v1202, 32
      %v1236 = vpop.permute.xlu0 %1235
      %1239 = vrot.lane.b32.xlu0 %v1199, 32
      %v1240 = vpop.permute.xlu0 %1239
      %1241 = vrot.lane.b32.xlu0 %v1201, 32
      %v1242 = vpop.permute.xlu0 %1241
      %v1243 = vsel %vm453, %v1240, %v1234
      %v1244 = vsel %vm453, %v1242, %v1236
      %v1249 = vsel %vm453, %v1234, %v1240
      %v1250 = vsel %vm453, %v1236, %v1242
      %v1251 = vmul.f32 %v1249, %v465
      %v1252 = vmul.f32 %v1243, %v466
      %v1253 = vmul.f32 %v1250, %v465
      %v1254 = vmul.f32 %v1244, %v466
      %s1255 = scalar_lea.vmem %s4, 16
      %v1256 = vld [vmem:[%s1255] sm:$0xff]
      %v1257 = vld [vmem:[%s1255 + $0x8] sm:$0xff]
      %v1259 = vsel %vm476, %v1256, 0
      %v1262 = vsel %vm476, %v1257, 0
      %1264 = vmatpush.msra.mxu0 0.0
      %1265 = vmatpush.msra.mxu0 0.0
      %1266 = vmatpush.msra.mxu0 0.0
      %1267 = vmatpush.msra.mxu0 0.0
      %1268 = vmatpush.msra.mxu0 0.0
      %1269 = vmatpush.msra.mxu0 0.0
      %1270 = vmatpush.msra.mxu0 0.0
      %1271 = vmatpush.msra.mxu0 0.0
      %1272 = vmatpush.msra.mxu0 0.0
      %1273 = vmatpush.msra.mxu0 0.0
      %1274 = vmatpush.msra.mxu0 0.0
      %1275 = vmatpush.msra.mxu0 0.0
      %1276 = vmatpush.msra.mxu0 0.0
      %1277 = vmatpush.msra.mxu0 0.0
      %1278 = vmatpush.msra.mxu0 %v1253
      %1279 = vmatpush.msra.mxu0 %v1251
      %1280 = vmatmul.f32.gmra.mxu0 %v1259
      %v1281 = vpop.f32.mrf.mxu0
      %v1282 = vadd.f32 0.0, %v1281
      %1283 = vmatmul.f32.gmra.mxu0 %v1262
      %v1284 = vpop.f32.mrf.mxu0
      %v1285 = vadd.f32 0.0, %v1284
      %1286 = vdwg.mxu0
      %1287 = vmatpush.msra.mxu0 0.0
      %1288 = vmatpush.msra.mxu0 0.0
      %1289 = vmatpush.msra.mxu0 0.0
      %1290 = vmatpush.msra.mxu0 0.0
      %1291 = vmatpush.msra.mxu0 0.0
      %1292 = vmatpush.msra.mxu0 0.0
      %1293 = vmatpush.msra.mxu0 0.0
      %1294 = vmatpush.msra.mxu0 0.0
      %1295 = vmatpush.msra.mxu0 0.0
      %1296 = vmatpush.msra.mxu0 0.0
      %1297 = vmatpush.msra.mxu0 0.0
      %1298 = vmatpush.msra.mxu0 0.0
      %1299 = vmatpush.msra.mxu0 0.0
      %1300 = vmatpush.msra.mxu0 0.0
      %1301 = vmatpush.msra.mxu0 %v1254
      %1302 = vmatpush.msra.mxu0 %v1252
      %1303 = vmatmul.f32.gmra.mxu0 %v1259
      %v1304 = vpop.f32.mrf.mxu0
      %v1305 = vadd.f32 0.0, %v1304
      %1306 = vmatmul.f32.gmra.mxu0 %v1262
      %v1307 = vpop.f32.mrf.mxu0
      %v1308 = vadd.f32 0.0, %v1307
      %1309 = vdwg.mxu0
      %v1311 = vsel %vm476, %v1231, 0
      %v1314 = vsel %vm476, %v1232, 0
      %1316 = vmatpush.msra.mxu0 0.0
      %1317 = vmatpush.msra.mxu0 0.0
      %1318 = vmatpush.msra.mxu0 0.0
      %1319 = vmatpush.msra.mxu0 0.0
      %1320 = vmatpush.msra.mxu0 0.0
      %1321 = vmatpush.msra.mxu0 0.0
      %1322 = vmatpush.msra.mxu0 0.0
      %1323 = vmatpush.msra.mxu0 0.0
      %1324 = vmatpush.msra.mxu0 0.0
      %1325 = vmatpush.msra.mxu0 0.0
      %1326 = vmatpush.msra.mxu0 0.0
      %1327 = vmatpush.msra.mxu0 0.0
      %1328 = vmatpush.msra.mxu0 0.0
      %1329 = vmatpush.msra.mxu0 0.0
      %1330 = vmatpush.msra.mxu0 %v1229
      %1331 = vmatpush.msra.mxu0 %v1227
      %1332 = vmatmul.f32.gmra.mxu0 %v1311
      %v1333 = vpop.f32.mrf.mxu0
      %v1334 = vadd.f32 %v1282, %v1333
      %1335 = vmatmul.f32.gmra.mxu0 %v1314
      %v1336 = vpop.f32.mrf.mxu0
      %v1337 = vadd.f32 %v1285, %v1336
      %1338 = vdwg.mxu0
      %1339 = vmatpush.msra.mxu0 0.0
      %1340 = vmatpush.msra.mxu0 0.0
      %1341 = vmatpush.msra.mxu0 0.0
      %1342 = vmatpush.msra.mxu0 0.0
      %1343 = vmatpush.msra.mxu0 0.0
      %1344 = vmatpush.msra.mxu0 0.0
      %1345 = vmatpush.msra.mxu0 0.0
      %1346 = vmatpush.msra.mxu0 0.0
      %1347 = vmatpush.msra.mxu0 0.0
      %1348 = vmatpush.msra.mxu0 0.0
      %1349 = vmatpush.msra.mxu0 0.0
      %1350 = vmatpush.msra.mxu0 0.0
      %1351 = vmatpush.msra.mxu0 0.0
      %1352 = vmatpush.msra.mxu0 0.0
      %1353 = vmatpush.msra.mxu0 %v1230
      %1354 = vmatpush.msra.mxu0 %v1228
      %1355 = vmatmul.f32.gmra.mxu0 %v1311
      %v1356 = vpop.f32.mrf.mxu0
      %v1357 = vadd.f32 %v1305, %v1356
      %1358 = vmatmul.f32.gmra.mxu0 %v1314
      %v1359 = vpop.f32.mrf.mxu0
      %v1360 = vadd.f32 %v1308, %v1359
      %1361 = vdwg.mxu0
      %1362 = vrot.lane.b32.xlu0 %v1200, 30
      %v1363 = vpop.permute.xlu0 %1362
      %1364 = vrot.lane.b32.xlu0 %v1202, 30
      %v1365 = vpop.permute.xlu0 %1364
      %1368 = vrot.lane.b32.xlu0 %v1199, 30
      %v1369 = vpop.permute.xlu0 %1368
      %1370 = vrot.lane.b32.xlu0 %v1201, 30
      %v1371 = vpop.permute.xlu0 %1370
      %v1372 = vsel %vm591, %v1369, %v1363
      %v1373 = vsel %vm591, %v1371, %v1365
      %v1378 = vsel %vm591, %v1363, %v1369
      %v1379 = vsel %vm591, %v1365, %v1371
      %v1380 = vmul.f32 %v1378, %v603
      %v1381 = vmul.f32 %v1372, %v604
      %v1382 = vmul.f32 %v1379, %v603
      %v1383 = vmul.f32 %v1373, %v604
      %s1384 = scalar_lea.vmem %s4, 32
      %v1385 = vld [vmem:[%s1384] sm:$0xff]
      %v1386 = vld [vmem:[%s1384 + $0x8] sm:$0xff]
      %v1388 = vsel %vm476, %v1385, 0
      %v1391 = vsel %vm476, %v1386, 0
      %1393 = vmatpush.msra.mxu0 0.0
      %1394 = vmatpush.msra.mxu0 0.0
      %1395 = vmatpush.msra.mxu0 0.0
      %1396 = vmatpush.msra.mxu0 0.0
      %1397 = vmatpush.msra.mxu0 0.0
      %1398 = vmatpush.msra.mxu0 0.0
      %1399 = vmatpush.msra.mxu0 0.0
      %1400 = vmatpush.msra.mxu0 0.0
      %1401 = vmatpush.msra.mxu0 0.0
      %1402 = vmatpush.msra.mxu0 0.0
      %1403 = vmatpush.msra.mxu0 0.0
      %1404 = vmatpush.msra.mxu0 0.0
      %1405 = vmatpush.msra.mxu0 0.0
      %1406 = vmatpush.msra.mxu0 0.0
      %1407 = vmatpush.msra.mxu0 %v1382
      %1408 = vmatpush.msra.mxu0 %v1380
      %1409 = vmatmul.f32.gmra.mxu0 %v1388
      %v1410 = vpop.f32.mrf.mxu0
      %v1411 = vadd.f32 0.0, %v1410
      %1412 = vmatmul.f32.gmra.mxu0 %v1391
      %v1413 = vpop.f32.mrf.mxu0
      %v1414 = vadd.f32 0.0, %v1413
      %1415 = vdwg.mxu0
      %1416 = vmatpush.msra.mxu0 0.0
      %1417 = vmatpush.msra.mxu0 0.0
      %1418 = vmatpush.msra.mxu0 0.0
      %1419 = vmatpush.msra.mxu0 0.0
      %1420 = vmatpush.msra.mxu0 0.0
      %1421 = vmatpush.msra.mxu0 0.0
      %1422 = vmatpush.msra.mxu0 0.0
      %1423 = vmatpush.msra.mxu0 0.0
      %1424 = vmatpush.msra.mxu0 0.0
      %1425 = vmatpush.msra.mxu0 0.0
      %1426 = vmatpush.msra.mxu0 0.0
      %1427 = vmatpush.msra.mxu0 0.0
      %1428 = vmatpush.msra.mxu0 0.0
      %1429 = vmatpush.msra.mxu0 0.0
      %1430 = vmatpush.msra.mxu0 %v1383
      %1431 = vmatpush.msra.mxu0 %v1381
      %1432 = vmatmul.f32.gmra.mxu0 %v1388
      %v1433 = vpop.f32.mrf.mxu0
      %v1434 = vadd.f32 0.0, %v1433
      %1435 = vmatmul.f32.gmra.mxu0 %v1391
      %v1436 = vpop.f32.mrf.mxu0
      %v1437 = vadd.f32 0.0, %v1436
      %1438 = vdwg.mxu0
      %v1439 = vadd.f32 %v1334, %v1411
      %v1440 = vadd.f32 %v1357, %v1434
      %v1441 = vadd.f32 %v1337, %v1414
      %v1442 = vadd.f32 %v1360, %v1437
      %1443 = vrot.lane.b32.xlu0 %v1200, 2
      %v1444 = vpop.permute.xlu0 %1443
      %1445 = vrot.lane.b32.xlu0 %v1202, 2
      %v1446 = vpop.permute.xlu0 %1445
      %1449 = vrot.lane.b32.xlu0 %v1199, 2
      %v1450 = vpop.permute.xlu0 %1449
      %1451 = vrot.lane.b32.xlu0 %v1201, 2
      %v1452 = vpop.permute.xlu0 %1451
      %v1453 = vsel %vm680, %v1450, %v1444
      %v1454 = vsel %vm680, %v1452, %v1446
      %v1459 = vsel %vm680, %v1444, %v1450
      %v1460 = vsel %vm680, %v1446, %v1452
      %v1461 = vmul.f32 %v1459, %v692
      %v1462 = vmul.f32 %v1453, %v693
      %v1463 = vmul.f32 %v1460, %v692
      %v1464 = vmul.f32 %v1454, %v693
      %s1465 = scalar_lea.vmem %s4, 48
      %v1466 = vld [vmem:[%s1465] sm:$0xff]
      %v1467 = vld [vmem:[%s1465 + $0x8] sm:$0xff]
      %v1469 = vsel %vm476, %v1466, 0
      %v1472 = vsel %vm476, %v1467, 0
      %1474 = vmatpush.msra.mxu0 0.0
      %1475 = vmatpush.msra.mxu0 0.0
      %1476 = vmatpush.msra.mxu0 0.0
      %1477 = vmatpush.msra.mxu0 0.0
      %1478 = vmatpush.msra.mxu0 0.0
      %1479 = vmatpush.msra.mxu0 0.0
      %1480 = vmatpush.msra.mxu0 0.0
      %1481 = vmatpush.msra.mxu0 0.0
      %1482 = vmatpush.msra.mxu0 0.0
      %1483 = vmatpush.msra.mxu0 0.0
      %1484 = vmatpush.msra.mxu0 0.0
      %1485 = vmatpush.msra.mxu0 0.0
      %1486 = vmatpush.msra.mxu0 0.0
      %1487 = vmatpush.msra.mxu0 0.0
      %1488 = vmatpush.msra.mxu0 %v1463
      %1489 = vmatpush.msra.mxu0 %v1461
      %1490 = vmatmul.f32.gmra.mxu0 %v1469
      %v1491 = vpop.f32.mrf.mxu0
      %v1492 = vadd.f32 0.0, %v1491
      %1493 = vmatmul.f32.gmra.mxu0 %v1472
      %v1494 = vpop.f32.mrf.mxu0
      %v1495 = vadd.f32 0.0, %v1494
      %1496 = vdwg.mxu0
      %1497 = vmatpush.msra.mxu0 0.0
      %1498 = vmatpush.msra.mxu0 0.0
      %1499 = vmatpush.msra.mxu0 0.0
      %1500 = vmatpush.msra.mxu0 0.0
      %1501 = vmatpush.msra.mxu0 0.0
      %1502 = vmatpush.msra.mxu0 0.0
      %1503 = vmatpush.msra.mxu0 0.0
      %1504 = vmatpush.msra.mxu0 0.0
      %1505 = vmatpush.msra.mxu0 0.0
      %1506 = vmatpush.msra.mxu0 0.0
      %1507 = vmatpush.msra.mxu0 0.0
      %1508 = vmatpush.msra.mxu0 0.0
      %1509 = vmatpush.msra.mxu0 0.0
      %1510 = vmatpush.msra.mxu0 0.0
      %1511 = vmatpush.msra.mxu0 %v1464
      %1512 = vmatpush.msra.mxu0 %v1462
      %1513 = vmatmul.f32.gmra.mxu0 %v1469
      %v1514 = vpop.f32.mrf.mxu0
      %v1515 = vadd.f32 0.0, %v1514
      %1516 = vmatmul.f32.gmra.mxu0 %v1472
      %v1517 = vpop.f32.mrf.mxu0
      %v1518 = vadd.f32 0.0, %v1517
      %1519 = vdwg.mxu0
      %v1520 = vadd.f32 %v1439, %v1492
      %v1521 = vadd.f32 %v1440, %v1515
      %v1522 = vadd.f32 %v1441, %v1495
      %v1523 = vadd.f32 %v1442, %v1518
      %v1524 = vmul.f32 %v1199, %v762
      %v1525 = vmul.f32 %v1200, %v763
      %v1526 = vmul.f32 %v1201, %v762
      %v1527 = vmul.f32 %v1202, %v763
      %s1528 = scalar_lea.vmem %s4, 64
      %v1529 = vld [vmem:[%s1528] sm:$0xff]
      %v1530 = vld [vmem:[%s1528 + $0x8] sm:$0xff]
      %v1532 = vsel %vm476, %v1529, 0
      %v1535 = vsel %vm476, %v1530, 0
      %1537 = vmatpush.msra.mxu0 0.0
      %1538 = vmatpush.msra.mxu0 0.0
      %1539 = vmatpush.msra.mxu0 0.0
      %1540 = vmatpush.msra.mxu0 0.0
      %1541 = vmatpush.msra.mxu0 0.0
      %1542 = vmatpush.msra.mxu0 0.0
      %1543 = vmatpush.msra.mxu0 0.0
      %1544 = vmatpush.msra.mxu0 0.0
      %1545 = vmatpush.msra.mxu0 0.0
      %1546 = vmatpush.msra.mxu0 0.0
      %1547 = vmatpush.msra.mxu0 0.0
      %1548 = vmatpush.msra.mxu0 0.0
      %1549 = vmatpush.msra.mxu0 0.0
      %1550 = vmatpush.msra.mxu0 0.0
      %1551 = vmatpush.msra.mxu0 %v1526
      %1552 = vmatpush.msra.mxu0 %v1524
      %1553 = vmatmul.f32.gmra.mxu0 %v1532
      %v1554 = vpop.f32.mrf.mxu0
      %v1555 = vadd.f32 0.0, %v1554
      %1556 = vmatmul.f32.gmra.mxu0 %v1535
      %v1557 = vpop.f32.mrf.mxu0
      %v1558 = vadd.f32 0.0, %v1557
      %1559 = vdwg.mxu0
      %1560 = vmatpush.msra.mxu0 0.0
      %1561 = vmatpush.msra.mxu0 0.0
      %1562 = vmatpush.msra.mxu0 0.0
      %1563 = vmatpush.msra.mxu0 0.0
      %1564 = vmatpush.msra.mxu0 0.0
      %1565 = vmatpush.msra.mxu0 0.0
      %1566 = vmatpush.msra.mxu0 0.0
      %1567 = vmatpush.msra.mxu0 0.0
      %1568 = vmatpush.msra.mxu0 0.0
      %1569 = vmatpush.msra.mxu0 0.0
      %1570 = vmatpush.msra.mxu0 0.0
      %1571 = vmatpush.msra.mxu0 0.0
      %1572 = vmatpush.msra.mxu0 0.0
      %1573 = vmatpush.msra.mxu0 0.0
      %1574 = vmatpush.msra.mxu0 %v1527
      %1575 = vmatpush.msra.mxu0 %v1525
      %1576 = vmatmul.f32.gmra.mxu0 %v1532
      %v1577 = vpop.f32.mrf.mxu0
      %v1578 = vadd.f32 0.0, %v1577
      %1579 = vmatmul.f32.gmra.mxu0 %v1535
      %v1580 = vpop.f32.mrf.mxu0
      %v1581 = vadd.f32 0.0, %v1580
      %1582 = vdwg.mxu0
      %v1583 = vadd.f32 %v1520, %v1555
      %v1584 = vadd.f32 %v1521, %v1578
      %v1585 = vadd.f32 %v1522, %v1558
      %v1586 = vadd.f32 %v1523, %v1581
      %1587 = vrot.lane.b32.xlu0 %v1199, 126
      %v1588 = vpop.permute.xlu0 %1587
      %1589 = vrot.lane.b32.xlu0 %v1200, 126
      %v1590 = vpop.permute.xlu0 %1589
      %1591 = vrot.lane.b32.xlu0 %v1201, 126
      %v1592 = vpop.permute.xlu0 %1591
      %1593 = vrot.lane.b32.xlu0 %v1202, 126
      %v1594 = vpop.permute.xlu0 %1593
      %v1595 = vsel %vm837, %v1588, %v1590
      %v1596 = vsel %vm837, %v1592, %v1594
      %v1603 = vsel %vm837, %v1590, %v1588
      %v1604 = vsel %vm837, %v1594, %v1592
      %v1605 = vmul.f32 %v1595, %v851
      %v1606 = vmul.f32 %v1603, %v852
      %v1607 = vmul.f32 %v1596, %v851
      %v1608 = vmul.f32 %v1604, %v852
      %s1609 = scalar_lea.vmem %s4, 80
      %v1610 = vld [vmem:[%s1609] sm:$0xff]
      %v1611 = vld [vmem:[%s1609 + $0x8] sm:$0xff]
      %v1613 = vsel %vm476, %v1610, 0
      %v1616 = vsel %vm476, %v1611, 0
      %1618 = vmatpush.msra.mxu0 0.0
      %1619 = vmatpush.msra.mxu0 0.0
      %1620 = vmatpush.msra.mxu0 0.0
      %1621 = vmatpush.msra.mxu0 0.0
      %1622 = vmatpush.msra.mxu0 0.0
      %1623 = vmatpush.msra.mxu0 0.0
      %1624 = vmatpush.msra.mxu0 0.0
      %1625 = vmatpush.msra.mxu0 0.0
      %1626 = vmatpush.msra.mxu0 0.0
      %1627 = vmatpush.msra.mxu0 0.0
      %1628 = vmatpush.msra.mxu0 0.0
      %1629 = vmatpush.msra.mxu0 0.0
      %1630 = vmatpush.msra.mxu0 0.0
      %1631 = vmatpush.msra.mxu0 0.0
      %1632 = vmatpush.msra.mxu0 %v1607
      %1633 = vmatpush.msra.mxu0 %v1605
      %1634 = vmatmul.f32.gmra.mxu0 %v1613
      %v1635 = vpop.f32.mrf.mxu0
      %v1636 = vadd.f32 0.0, %v1635
      %1637 = vmatmul.f32.gmra.mxu0 %v1616
      %v1638 = vpop.f32.mrf.mxu0
      %v1639 = vadd.f32 0.0, %v1638
      %1640 = vdwg.mxu0
      %1641 = vmatpush.msra.mxu0 0.0
      %1642 = vmatpush.msra.mxu0 0.0
      %1643 = vmatpush.msra.mxu0 0.0
      %1644 = vmatpush.msra.mxu0 0.0
      %1645 = vmatpush.msra.mxu0 0.0
      %1646 = vmatpush.msra.mxu0 0.0
      %1647 = vmatpush.msra.mxu0 0.0
      %1648 = vmatpush.msra.mxu0 0.0
      %1649 = vmatpush.msra.mxu0 0.0
      %1650 = vmatpush.msra.mxu0 0.0
      %1651 = vmatpush.msra.mxu0 0.0
      %1652 = vmatpush.msra.mxu0 0.0
      %1653 = vmatpush.msra.mxu0 0.0
      %1654 = vmatpush.msra.mxu0 0.0
      %1655 = vmatpush.msra.mxu0 %v1608
      %1656 = vmatpush.msra.mxu0 %v1606
      %1657 = vmatmul.f32.gmra.mxu0 %v1613
      %v1658 = vpop.f32.mrf.mxu0
      %v1659 = vadd.f32 0.0, %v1658
      %1660 = vmatmul.f32.gmra.mxu0 %v1616
      %v1661 = vpop.f32.mrf.mxu0
      %v1662 = vadd.f32 0.0, %v1661
      %1663 = vdwg.mxu0
      %v1664 = vadd.f32 %v1583, %v1636
      %v1665 = vadd.f32 %v1584, %v1659
      %v1666 = vadd.f32 %v1585, %v1639
      %v1667 = vadd.f32 %v1586, %v1662
      %1668 = vrot.lane.b32.xlu0 %v1199, 98
      %v1669 = vpop.permute.xlu0 %1668
      %1670 = vrot.lane.b32.xlu0 %v1200, 98
      %v1671 = vpop.permute.xlu0 %1670
      %1672 = vrot.lane.b32.xlu0 %v1201, 98
      %v1673 = vpop.permute.xlu0 %1672
      %1674 = vrot.lane.b32.xlu0 %v1202, 98
      %v1675 = vpop.permute.xlu0 %1674
      %v1676 = vsel %vm926, %v1669, %v1671
      %v1677 = vsel %vm926, %v1673, %v1675
      %v1684 = vsel %vm926, %v1671, %v1669
      %v1685 = vsel %vm926, %v1675, %v1673
      %v1686 = vmul.f32 %v1676, %v940
      %v1687 = vmul.f32 %v1684, %v941
      %v1688 = vmul.f32 %v1677, %v940
      %v1689 = vmul.f32 %v1685, %v941
      %s1690 = scalar_lea.vmem %s4, 96
      %v1691 = vld [vmem:[%s1690] sm:$0xff]
      %v1692 = vld [vmem:[%s1690 + $0x8] sm:$0xff]
      %v1694 = vsel %vm476, %v1691, 0
      %v1697 = vsel %vm476, %v1692, 0
      %1699 = vmatpush.msra.mxu0 0.0
      %1700 = vmatpush.msra.mxu0 0.0
      %1701 = vmatpush.msra.mxu0 0.0
      %1702 = vmatpush.msra.mxu0 0.0
      %1703 = vmatpush.msra.mxu0 0.0
      %1704 = vmatpush.msra.mxu0 0.0
      %1705 = vmatpush.msra.mxu0 0.0
      %1706 = vmatpush.msra.mxu0 0.0
      %1707 = vmatpush.msra.mxu0 0.0
      %1708 = vmatpush.msra.mxu0 0.0
      %1709 = vmatpush.msra.mxu0 0.0
      %1710 = vmatpush.msra.mxu0 0.0
      %1711 = vmatpush.msra.mxu0 0.0
      %1712 = vmatpush.msra.mxu0 0.0
      %1713 = vmatpush.msra.mxu0 %v1688
      %1714 = vmatpush.msra.mxu0 %v1686
      %1715 = vmatmul.f32.gmra.mxu0 %v1694
      %v1716 = vpop.f32.mrf.mxu0
      %v1717 = vadd.f32 0.0, %v1716
      %1718 = vmatmul.f32.gmra.mxu0 %v1697
      %v1719 = vpop.f32.mrf.mxu0
      %v1720 = vadd.f32 0.0, %v1719
      %1721 = vdwg.mxu0
      %1722 = vmatpush.msra.mxu0 0.0
      %1723 = vmatpush.msra.mxu0 0.0
      %1724 = vmatpush.msra.mxu0 0.0
      %1725 = vmatpush.msra.mxu0 0.0
      %1726 = vmatpush.msra.mxu0 0.0
      %1727 = vmatpush.msra.mxu0 0.0
      %1728 = vmatpush.msra.mxu0 0.0
      %1729 = vmatpush.msra.mxu0 0.0
      %1730 = vmatpush.msra.mxu0 0.0
      %1731 = vmatpush.msra.mxu0 0.0
      %1732 = vmatpush.msra.mxu0 0.0
      %1733 = vmatpush.msra.mxu0 0.0
      %1734 = vmatpush.msra.mxu0 0.0
      %1735 = vmatpush.msra.mxu0 0.0
      %1736 = vmatpush.msra.mxu0 %v1689
      %1737 = vmatpush.msra.mxu0 %v1687
      %1738 = vmatmul.f32.gmra.mxu0 %v1694
      %v1739 = vpop.f32.mrf.mxu0
      %v1740 = vadd.f32 0.0, %v1739
      %1741 = vmatmul.f32.gmra.mxu0 %v1697
      %v1742 = vpop.f32.mrf.mxu0
      %v1743 = vadd.f32 0.0, %v1742
      %1744 = vdwg.mxu0
      %v1745 = vadd.f32 %v1664, %v1717
      %v1746 = vadd.f32 %v1665, %v1740
      %v1747 = vadd.f32 %v1666, %v1720
      %v1748 = vadd.f32 %v1667, %v1743
      %1749 = vrot.lane.b32.xlu0 %v1199, 96
      %v1750 = vpop.permute.xlu0 %1749
      %1751 = vrot.lane.b32.xlu0 %v1200, 96
      %v1752 = vpop.permute.xlu0 %1751
      %1753 = vrot.lane.b32.xlu0 %v1201, 96
      %v1754 = vpop.permute.xlu0 %1753
      %1755 = vrot.lane.b32.xlu0 %v1202, 96
      %v1756 = vpop.permute.xlu0 %1755
      %v1757 = vsel %vm1015, %v1750, %v1752
      %v1758 = vsel %vm1015, %v1754, %v1756
      %v1765 = vsel %vm1015, %v1752, %v1750
      %v1766 = vsel %vm1015, %v1756, %v1754
      %v1767 = vmul.f32 %v1757, %v1029
      %v1768 = vmul.f32 %v1765, %v1030
      %v1769 = vmul.f32 %v1758, %v1029
      %v1770 = vmul.f32 %v1766, %v1030
      %s1771 = scalar_lea.vmem %s4, 112
      %v1772 = vld [vmem:[%s1771] sm:$0xff]
      %v1773 = vld [vmem:[%s1771 + $0x8] sm:$0xff]
      %v1775 = vsel %vm476, %v1772, 0
      %v1778 = vsel %vm476, %v1773, 0
      %1780 = vmatpush.msra.mxu0 0.0
      %1781 = vmatpush.msra.mxu0 0.0
      %1782 = vmatpush.msra.mxu0 0.0
      %1783 = vmatpush.msra.mxu0 0.0
      %1784 = vmatpush.msra.mxu0 0.0
      %1785 = vmatpush.msra.mxu0 0.0
      %1786 = vmatpush.msra.mxu0 0.0
      %1787 = vmatpush.msra.mxu0 0.0
      %1788 = vmatpush.msra.mxu0 0.0
      %1789 = vmatpush.msra.mxu0 0.0
      %1790 = vmatpush.msra.mxu0 0.0
      %1791 = vmatpush.msra.mxu0 0.0
      %1792 = vmatpush.msra.mxu0 0.0
      %1793 = vmatpush.msra.mxu0 0.0
      %1794 = vmatpush.msra.mxu0 %v1769
      %1795 = vmatpush.msra.mxu0 %v1767
      %1796 = vmatmul.f32.gmra.mxu0 %v1775
      %v1797 = vpop.f32.mrf.mxu0
      %v1798 = vadd.f32 0.0, %v1797
      %1799 = vmatmul.f32.gmra.mxu0 %v1778
      %v1800 = vpop.f32.mrf.mxu0
      %v1801 = vadd.f32 0.0, %v1800
      %1802 = vdwg.mxu0
      %1803 = vmatpush.msra.mxu0 0.0
      %1804 = vmatpush.msra.mxu0 0.0
      %1805 = vmatpush.msra.mxu0 0.0
      %1806 = vmatpush.msra.mxu0 0.0
      %1807 = vmatpush.msra.mxu0 0.0
      %1808 = vmatpush.msra.mxu0 0.0
      %1809 = vmatpush.msra.mxu0 0.0
      %1810 = vmatpush.msra.mxu0 0.0
      %1811 = vmatpush.msra.mxu0 0.0
      %1812 = vmatpush.msra.mxu0 0.0
      %1813 = vmatpush.msra.mxu0 0.0
      %1814 = vmatpush.msra.mxu0 0.0
      %1815 = vmatpush.msra.mxu0 0.0
      %1816 = vmatpush.msra.mxu0 0.0
      %1817 = vmatpush.msra.mxu0 %v1770
      %1818 = vmatpush.msra.mxu0 %v1768
      %1819 = vmatmul.f32.gmra.mxu0 %v1775
      %v1820 = vpop.f32.mrf.mxu0
      %v1821 = vadd.f32 0.0, %v1820
      %1822 = vmatmul.f32.gmra.mxu0 %v1778
      %v1823 = vpop.f32.mrf.mxu0
      %v1824 = vadd.f32 0.0, %v1823
      %1825 = vdwg.mxu0
      %v1826 = vadd.f32 %v1745, %v1798
      %v1827 = vadd.f32 %v1746, %v1821
      %v1828 = vadd.f32 %v1747, %v1801
      %v1829 = vadd.f32 %v1748, %v1824
      %1830 = vrot.lane.b32.xlu0 %v1199, 94
      %v1831 = vpop.permute.xlu0 %1830
      %1832 = vrot.lane.b32.xlu0 %v1200, 94
      %v1833 = vpop.permute.xlu0 %1832
      %1834 = vrot.lane.b32.xlu0 %v1201, 94
      %v1835 = vpop.permute.xlu0 %1834
      %1836 = vrot.lane.b32.xlu0 %v1202, 94
      %v1837 = vpop.permute.xlu0 %1836
      %v1838 = vsel %vm1104, %v1831, %v1833
      %v1839 = vsel %vm1104, %v1835, %v1837
      %v1846 = vsel %vm1104, %v1833, %v1831
      %v1847 = vsel %vm1104, %v1837, %v1835
      %v1848 = vmul.f32 %v1838, %v1118
      %v1849 = vmul.f32 %v1846, %v1119
      %v1850 = vmul.f32 %v1839, %v1118
      %v1851 = vmul.f32 %v1847, %v1119
      %s1852 = scalar_lea.vmem %s4, 128
      %v1853 = vld [vmem:[%s1852] sm:$0xff]
      %v1854 = vld [vmem:[%s1852 + $0x8] sm:$0xff]
      %v1856 = vsel %vm476, %v1853, 0
      %v1859 = vsel %vm476, %v1854, 0
      %1861 = vmatpush.msra.mxu0 0.0
      %1862 = vmatpush.msra.mxu0 0.0
      %1863 = vmatpush.msra.mxu0 0.0
      %1864 = vmatpush.msra.mxu0 0.0
      %1865 = vmatpush.msra.mxu0 0.0
      %1866 = vmatpush.msra.mxu0 0.0
      %1867 = vmatpush.msra.mxu0 0.0
      %1868 = vmatpush.msra.mxu0 0.0
      %1869 = vmatpush.msra.mxu0 0.0
      %1870 = vmatpush.msra.mxu0 0.0
      %1871 = vmatpush.msra.mxu0 0.0
      %1872 = vmatpush.msra.mxu0 0.0
      %1873 = vmatpush.msra.mxu0 0.0
      %1874 = vmatpush.msra.mxu0 0.0
      %1875 = vmatpush.msra.mxu0 %v1850
      %1876 = vmatpush.msra.mxu0 %v1848
      %1877 = vmatmul.f32.gmra.mxu0 %v1856
      %v1878 = vpop.f32.mrf.mxu0
      %v1879 = vadd.f32 0.0, %v1878
      %1880 = vmatmul.f32.gmra.mxu0 %v1859
      %v1881 = vpop.f32.mrf.mxu0
      %v1882 = vadd.f32 0.0, %v1881
      %1883 = vdwg.mxu0
      %1884 = vmatpush.msra.mxu0 0.0
      %1885 = vmatpush.msra.mxu0 0.0
      %1886 = vmatpush.msra.mxu0 0.0
      %1887 = vmatpush.msra.mxu0 0.0
      %1888 = vmatpush.msra.mxu0 0.0
      %1889 = vmatpush.msra.mxu0 0.0
      %1890 = vmatpush.msra.mxu0 0.0
      %1891 = vmatpush.msra.mxu0 0.0
      %1892 = vmatpush.msra.mxu0 0.0
      %1893 = vmatpush.msra.mxu0 0.0
      %1894 = vmatpush.msra.mxu0 0.0
      %1895 = vmatpush.msra.mxu0 0.0
      %1896 = vmatpush.msra.mxu0 0.0
      %1897 = vmatpush.msra.mxu0 0.0
      %1898 = vmatpush.msra.mxu0 %v1851
      %1899 = vmatpush.msra.mxu0 %v1849
      %1900 = vmatmul.f32.gmra.mxu0 %v1856
      %v1901 = vpop.f32.mrf.mxu0
      %v1902 = vadd.f32 0.0, %v1901
      %1903 = vmatmul.f32.gmra.mxu0 %v1859
      %v1904 = vpop.f32.mrf.mxu0
      %v1905 = vadd.f32 0.0, %v1904
      %1906 = vdwg.mxu0
      %v1907 = vadd.f32 %v1826, %v1879
      %v1908 = vadd.f32 %v1827, %v1902
      %v1909 = vadd.f32 %v1828, %v1882
      %v1910 = vadd.f32 %v1829, %v1905
      %1912 = vset.pattern.permute.xlu0 0
      %1913 = vperm.xlu0 %1912, %v1203
      %v1914 = vpop.permute.xlu0 %1913
      %1917 = vset.pattern.permute.xlu0 0
      %1918 = vperm.xlu0 %1917, %v1204
      %v1919 = vpop.permute.xlu0 %1918
      %v1921 = vadd.f32 %v1907, %v1914
      %v1922 = vadd.f32 %v1908, %v1914
      %v1923 = vadd.f32 %v1909, %v1919
      %v1924 = vadd.f32 %v1910, %v1919
      %v1925 = vmax.f32 %v1921, 0.0
      %v1926 = vmax.f32 %v1922, 0.0
      %v1927 = vmax.f32 %v1923, 0.0
      %v1928 = vmax.f32 %v1924, 0.0
      %v1929 = vld [vmem:[%s7] sm:$0x3]
      %v1931 = vsel %vm476, %v1929, 0
      %1933 = vmatpush.msra.mxu0 0.0
      %1934 = vmatpush.msra.mxu0 0.0
      %1935 = vmatpush.msra.mxu0 0.0
      %1936 = vmatpush.msra.mxu0 0.0
      %1937 = vmatpush.msra.mxu0 0.0
      %1938 = vmatpush.msra.mxu0 0.0
      %1939 = vmatpush.msra.mxu0 0.0
      %1940 = vmatpush.msra.mxu0 0.0
      %1941 = vmatpush.msra.mxu0 0.0
      %1942 = vmatpush.msra.mxu0 0.0
      %1943 = vmatpush.msra.mxu0 0.0
      %1944 = vmatpush.msra.mxu0 0.0
      %1945 = vmatpush.msra.mxu0 0.0
      %1946 = vmatpush.msra.mxu0 0.0
      %1947 = vmatpush.msra.mxu0 %v1927
      %1948 = vmatpush.msra.mxu0 %v1925
      %1949 = vmatmul.f32.gmra.mxu0 %v1931
      %v1950 = vpop.f32.mrf.mxu0
      %v1951 = vadd.f32 0.0, %v1950
      %1952 = vdwg.mxu0
      %1953 = vmatpush.msra.mxu0 0.0
      %1954 = vmatpush.msra.mxu0 0.0
      %1955 = vmatpush.msra.mxu0 0.0
      %1956 = vmatpush.msra.mxu0 0.0
      %1957 = vmatpush.msra.mxu0 0.0
      %1958 = vmatpush.msra.mxu0 0.0
      %1959 = vmatpush.msra.mxu0 0.0
      %1960 = vmatpush.msra.mxu0 0.0
      %1961 = vmatpush.msra.mxu0 0.0
      %1962 = vmatpush.msra.mxu0 0.0
      %1963 = vmatpush.msra.mxu0 0.0
      %1964 = vmatpush.msra.mxu0 0.0
      %1965 = vmatpush.msra.mxu0 0.0
      %1966 = vmatpush.msra.mxu0 0.0
      %1967 = vmatpush.msra.mxu0 %v1928
      %1968 = vmatpush.msra.mxu0 %v1926
      %1969 = vmatmul.f32.gmra.mxu0 %v1931
      %v1970 = vpop.f32.mrf.mxu0
      %v1971 = vadd.f32 0.0, %v1970
      %1972 = vdwg.mxu0
      %v1973 = vld [vmem:[%s6] sm:$0x3]
      %v1975 = vperm.slane %v1973, 0
      %v1976 = vperm.slane %v1973, 1
      %v1979 = vmul.f32 %v1951, %v1975
      %v1980 = vmul.f32 %v1971, %v1976
      %vm1981 = vcmask 1041408
      %v1982 = vsel %vm1981, %v1979, 0.0
      %v1983 = vsel %vm1981, %v1980, 0.0
      %v1984 = vadd.f32 %v1982, %v1983
      %1985 = vadd.xlane.f32.xlu0 %v1984
      %v1986 = vpop.xlane.xlu0 %1985
      %v1987 = vld [vmem:[%s8] sm:$0x3]
      %v1988 = vadd.f32 %v1986, %v1987
      %v1990 = vrot.slane %v1988, 1
      %v1992 = vmax.f32 %v1988, %v1990
      %v1993 = vsub.f32 %v1988, %v1992
      %v1994 = vmul.f32 %v1993, 1.442695
      %v1995 = vpow.pop %v1994
      %v1997 = vrot.slane %v1992, 7
      %v1999 = vsub.f32 %v1988, %v1997
      %v2000 = vmul.f32 %v1999, 1.442695
      %v2001 = vpow.pop %v2000
      %v2003 = vrot.slane %v2001, 1
      %v2005 = vadd.f32 %v1995, %v2003
      %v2006 = vlog2.pop %v2005
      %v2007 = vmul.f32 %v2006, 0.6931472
      %v2008 = vadd.f32 %v1992, %v2007
      %v2009 = vsub.f32 %v1988, %v2008
      %v2011 = vrot.slane %v2008, 7
      %v2013 = vsub.f32 %v1988, %v2011
      %v2014 = vrot.slane %v1988, 7
      %vm2016 = vcmp.gt.f32.partialorder %v1988, %v2014
      %v2017 = vsel %vm2016, 1, 0
      %v2018 = vcvt.s32.f32 %v2017
      %v2019 = vlaneseq
      %v2020 = vand.u32 %v2019, 127
      %vm2021 = vcmp.eq.s32.totalorder %v2020, 0
      %vm2022 = vcmp.eq.s32.totalorder %v2020, 1
      %vm2023 = vcmp.eq.s32.totalorder %v2020, 2
      %2025 = vset.pattern.permute.xlu0 0
      %2026 = vperm.xlu0 %2025, %v2018
      %v2027 = vpop.permute.xlu0 %2026
      %v2029 = vsel %vm2023, %v2027, 0.0
      %2031 = vset.pattern.permute.xlu0 0
      %2032 = vperm.xlu0 %2031, %v2013
      %v2033 = vpop.permute.xlu0 %2032
      %v2035 = vsel %vm2022, %v2033, %v2029
      %2037 = vset.pattern.permute.xlu0 0
      %2038 = vperm.xlu0 %2037, %v2009
      %v2039 = vpop.permute.xlu0 %2038
      %v2042 = vrot.slane %v2035, 1
      %v2044 = vsel %vm2021, %v2039, %v2042
      %2045 = vst [vmem:[%s328] sm:$0x1] %v2044
      %p2046 = scmp.lt.s32.totalorder %s20, 1
      %s2047 = scalar_select %p2046, %s20, 1
      %s2048 = scalar_lea.vmem %s9, %s2047
      // Predicated region
      $region57: #{feedforward_gate_i.1} parent=55 // pred_check
        %p2049 = pneg %p232
      $region58: #{feedforward_gate_i.1} parent=55 // pred_check_branch
        %2051 = sbr.rel (%p2049) target = $region60
      $region59: #{feedforward_gate_i.1} parent=55 // pred_region
        _
      $region60: #{feedforward_gate_i.1} parent=55 // pred_fallthru
        _
    $region56: #{feedforward_gate_i.1} parent=5 // pred_fallthru
      _
    %p2052 = scmp.le.s32.totalorder 2, %s15
    // Predicated region
    $region61: #{feedforward_gate_i.1} parent=5 // pred_check
      %p2053 = pneg %p2052
    $region62: #{feedforward_gate_i.1} parent=5 // pred_check_branch
      %2055 = sbr.rel (%p2053) target = $region64
    $region63: #{feedforward_gate_i.1} parent=5 // pred_region
      %s2056 = ssub.s32 %s15, 2
      // Predicated region
      $region65: #{feedforward_gate_i.1} parent=63 // pred_check
        %p2057 = pneg %p238
      $region66: #{feedforward_gate_i.1} parent=63 // pred_check_branch
        %2059 = sbr.rel (%p2057) target = $region68
      $region67: #{feedforward_gate_i.1} parent=63 // pred_region
        %p2060 = scmp.lt.s32.totalorder %s21, 1
        %s2061 = scalar_select %p2060, %s21, 1
        %s2062 = scalar_lea.vmem %s9, %s2061
      $region68: #{feedforward_gate_i.1} parent=63 // pred_fallthru
        _
    $region64: #{feedforward_gate_i.1} parent=5 // pred_fallthru
      _
  $region6: #{feedforward_gate_i.1} parent=0 // loop_footer
    %s19 = sadd.s32 1, %s15
  $region7: #{feedforward_gate_i.1} parent=0 // loop_footer_branch
    %14 = sbr.rel target = $region3
  $region8: #{feedforward_gate_i.1} parent=0 // loop_exit
    _

</llo_original>
